<compile_context>
chip_gen: v6e
topology: v6e:2x2x1
jax: 0.10.0
libtpu: 0.0.40
codegen_flags: <defaults>
</compile_context>

<pallas_src>
import jax
import jax.numpy as jnp
from jax.experimental import pallas as pl
from jax.experimental.pallas import tpu as pltpu

IN_DIM = 256          # model input width
OUT_DIM = 10          # real number of classes
OUT_PAD = 16          # padded output width (full-array last dim for the out tile)
NEG_BIG = -1e30       # additive mask value for padded logits
_HIGH = jax.lax.Precision.HIGHEST


def _round_up(n, m):
    return ((n + m - 1) // m) * m


def _mlp_logsoftmax_kernel(x_ref, w1_ref, b1_ref, w2_ref, b2_ref,
                           w3_ref, b3_ref, mask_ref, o_ref):
    x = x_ref[...]                                                    # (TB, 256)

    h1 = jnp.dot(x, w1_ref[...], preferred_element_type=jnp.float32,
                 precision=_HIGH)
    h1 = jnp.maximum(h1 + b1_ref[...], 0.0)                           # (TB, 64)

    h2 = jnp.dot(h1, w2_ref[...], preferred_element_type=jnp.float32,
                 precision=_HIGH)
    h2 = jnp.maximum(h2 + b2_ref[...], 0.0)                           # (TB, 16)

    h3 = jnp.dot(h2, w3_ref[...], preferred_element_type=jnp.float32,
                 precision=_HIGH)
    h3 = jnp.maximum(h3 + b3_ref[...], 0.0)                           # (TB, 16) padded

    # Additive mask: 0 on real lanes, NEG_BIG on padded lanes.  relu >= 0 so the
    # row max comes from a real lane and exp(padded - m) underflows to exactly 0.
    h3 = h3 + mask_ref[...]

    # Numerically stable log_softmax over dim=1.
    m = jnp.max(h3, axis=-1, keepdims=True)
    s = h3 - m
    lse = jnp.log(jnp.sum(jnp.exp(s), axis=-1, keepdims=True))
    o_ref[...] = (s - lse).astype(o_ref.dtype)                        # (TB, 16)


def _choose_tiling(B, tb):
    """Pick (TB, nb) with TB % 8 == 0, minimal padding, >=2 steps when B > 8."""
    tb = max(8, _round_up(tb, 8))                # (8,128) sublane constraint
    min_steps = 2 if B > 8 else 1                # keep both v7x TCs busy
    nb = max(pl.cdiv(B, tb), min_steps)
    TB = _round_up(pl.cdiv(B, nb), 8)            # balance -> padding <= ~8*nb rows
    return TB, nb


def model_forward(x, params, tb=4096):
    """x: (B, 256) float32; params: dict of W1,b1,W2,b2,W3,b3. Returns (B, 10)."""
    B, D = x.shape
    assert D == IN_DIM
    w1, b1 = params["W1"], params["b1"]
    w2, b2 = params["W2"], params["b2"]
    w3, b3 = params["W3"], params["b3"]

    # Pad the last layer to OUT_PAD lanes (layout plumbing, done once in JAX).
    w3p = jnp.zeros((w3.shape[0], OUT_PAD), w3.dtype).at[:, :OUT_DIM].set(w3)
    b3p = jnp.zeros((1, OUT_PAD), b3.dtype).at[:, :OUT_DIM].set(b3)
    mask = jnp.full((1, OUT_PAD), NEG_BIG, jnp.float32).at[:, :OUT_DIM].set(0.0)

    TB, nb = _choose_tiling(B, tb)
    B_pad = nb * TB
    if B_pad != B:
        x = jnp.pad(x, ((0, B_pad - B), (0, 0)))

    const2d = lambda i: (0, 0)  # weights/biases/mask stay VMEM-resident across steps

    out = pl.pallas_call(
        _mlp_logsoftmax_kernel,
        grid=(nb,),
        out_shape=jax.ShapeDtypeStruct((B_pad, OUT_PAD), jnp.float32),
        in_specs=[
            pl.BlockSpec((TB, D), lambda i: (i, 0)),         # x: tiled over batch
            pl.BlockSpec(w1.shape, const2d),
            pl.BlockSpec(b1.shape, const2d),
            pl.BlockSpec(w2.shape, const2d),
            pl.BlockSpec(b2.shape, const2d),
            pl.BlockSpec(w3p.shape, const2d),
            pl.BlockSpec(b3p.shape, const2d),
            pl.BlockSpec(mask.shape, const2d),
        ],
        out_specs=pl.BlockSpec((TB, OUT_PAD), lambda i: (i, 0)),
        compiler_params=pltpu.CompilerParams(
            dimension_semantics=("parallel",)),
    )(x, w1, b1, w2, b2, w3p, b3p, mask)

    # OUT_PAD=16 keeps this slice cheap (64 B/row read, 40 B/row write).
    return out[:B, :OUT_DIM]


def init_params(key):
    ks = jax.random.split(key, 6)

    def dense(kw, kb, fan_in, fan_out):
        w = jax.random.normal(kw, (fan_in, fan_out), jnp.float32) * 0.05
        b = jax.random.normal(kb, (1, fan_out), jnp.float32) * 0.05
        return w, b

    W1, b1 = dense(ks[0], ks[1], 256, 64)
    W2, b2 = dense(ks[2], ks[3], 64, 16)
    W3, b3 = dense(ks[4], ks[5], 16, 10)
    return {"W1": W1, "b1": b1, "W2": W2, "b2": b2, "W3": W3, "b3": b3}


def _reference(x, p):
    h = jnp.maximum(jnp.dot(x, p["W1"], precision=_HIGH) + p["b1"], 0.0)
    h = jnp.maximum(jnp.dot(h, p["W2"], precision=_HIGH) + p["b2"], 0.0)
    h = jnp.maximum(jnp.dot(h, p["W3"], precision=_HIGH) + p["b3"], 0.0)
    return jax.nn.log_softmax(h, axis=1)


if __name__ == "__main__":
    key = jax.random.PRNGKey(0)
    kx, kp = jax.random.split(key)

    B = 8
    x = jax.random.normal(kx, (B, 256), jnp.float32)
    params = init_params(kp)

    out = jax.block_until_ready(model_forward(x, params))
    ref = _reference(x, params)
    assert out.shape == (B, 10)
    assert jnp.allclose(out, ref, atol=1e-5, rtol=1e-5), "mismatch vs reference"

    # Also exercise a batch that is not a multiple of the tile (padding path +
    # multi-step grid, i.e. the v7x two-TensorCore path).
    B2 = 20
    x2 = jax.random.normal(jax.random.PRNGKey(1), (B2, 256), jnp.float32)
    out2 = jax.block_until_ready(model_forward(x2, params, tb=16))
    assert out2.shape == (B2, 10)
    assert jnp.allclose(out2, _reference(x2, params), atol=1e-5, rtol=1e-5)

    print("KERNEL_OK")
</pallas_src>

<mosaic_0001>
module attributes {stable_mosaic.version = 11 : i64} {
  func.func @_mlp_logsoftmax_kernel(%arg0: i32, %arg1: memref<8x256xf32, #tpu.memory_space<vmem>>, %arg2: memref<256x64xf32, #tpu.memory_space<vmem>>, %arg3: memref<1x64xf32, #tpu.memory_space<vmem>>, %arg4: memref<64x16xf32, #tpu.memory_space<vmem>>, %arg5: memref<1x16xf32, #tpu.memory_space<vmem>>, %arg6: memref<16x16xf32, #tpu.memory_space<vmem>>, %arg7: memref<1x16xf32, #tpu.memory_space<vmem>>, %arg8: memref<1x16xf32, #tpu.memory_space<vmem>>, %arg9: memref<8x16xf32, #tpu.memory_space<vmem>>) attributes {dimension_semantics = [#tpu.dimension_semantics<parallel>], iteration_bounds = array<i64: 1>, scalar_prefetch = 0 : i64, scratch_operands = 0 : i64, tpu.core_type = #tpu.core_type<tc>, window_params = [{transform_indices = @transform_0, window_bounds = array<i64: 8, 256>}, {pipeline_mode = #tpu.pipeline_mode<synchronous>, transform_indices = @transform_1, window_bounds = array<i64: 256, 64>}, {pipeline_mode = #tpu.pipeline_mode<synchronous>, transform_indices = @transform_2, window_bounds = array<i64: 1, 64>}, {pipeline_mode = #tpu.pipeline_mode<synchronous>, transform_indices = @transform_3, window_bounds = array<i64: 64, 16>}, {pipeline_mode = #tpu.pipeline_mode<synchronous>, transform_indices = @transform_4, window_bounds = array<i64: 1, 16>}, {pipeline_mode = #tpu.pipeline_mode<synchronous>, transform_indices = @transform_5, window_bounds = array<i64: 16, 16>}, {pipeline_mode = #tpu.pipeline_mode<synchronous>, transform_indices = @transform_6, window_bounds = array<i64: 1, 16>}, {pipeline_mode = #tpu.pipeline_mode<synchronous>, transform_indices = @transform_7, window_bounds = array<i64: 1, 16>}, {transform_indices = @transform_8, window_bounds = array<i64: 8, 16>}]} {
    %c0 = arith.constant 0 : index
    %c0_0 = arith.constant 0 : index
    %0 = vector.load %arg1[%c0, %c0_0] : memref<8x256xf32, #tpu.memory_space<vmem>>, vector<8x256xf32>
    %c0_1 = arith.constant 0 : index
    %c0_2 = arith.constant 0 : index
    %1 = vector.load %arg2[%c0_1, %c0_2] : memref<256x64xf32, #tpu.memory_space<vmem>>, vector<256x64xf32>
    %cst = arith.constant dense<0.000000e+00> : vector<8x64xf32>
    %2 = tpu.matmul %0, %1, %cst {dimension_numbers = #tpu.dot_dimension_numbers<[1], [0], [0], [1], [0, 0, 1, 1], [], []>, precision = #tpu.contract_precision<fp32>} : vector<8x256xf32>, vector<256x64xf32>, vector<8x64xf32> -> vector<8x64xf32>
    %c0_3 = arith.constant 0 : index
    %c0_4 = arith.constant 0 : index
    %3 = vector.load %arg3[%c0_3, %c0_4] : memref<1x64xf32, #tpu.memory_space<vmem>>, vector<1x64xf32>
    %4 = vector.broadcast %3 : vector<1x64xf32> to vector<8x64xf32>
    %5 = arith.addf %2, %4 : vector<8x64xf32>
    %cst_5 = arith.constant 0.000000e+00 : f32
    %6 = vector.broadcast %cst_5 : f32 to vector<8x64xf32>
    %7 = arith.maximumf %5, %6 : vector<8x64xf32>
    %c0_6 = arith.constant 0 : index
    %c0_7 = arith.constant 0 : index
    %8 = vector.load %arg4[%c0_6, %c0_7] : memref<64x16xf32, #tpu.memory_space<vmem>>, vector<64x16xf32>
    %cst_8 = arith.constant dense<0.000000e+00> : vector<8x16xf32>
    %9 = tpu.matmul %7, %8, %cst_8 {dimension_numbers = #tpu.dot_dimension_numbers<[1], [0], [0], [1], [0, 0, 1, 1], [], []>, precision = #tpu.contract_precision<fp32>} : vector<8x64xf32>, vector<64x16xf32>, vector<8x16xf32> -> vector<8x16xf32>
    %c0_9 = arith.constant 0 : index
    %c0_10 = arith.constant 0 : index
    %10 = vector.load %arg5[%c0_9, %c0_10] : memref<1x16xf32, #tpu.memory_space<vmem>>, vector<1x16xf32>
    %11 = vector.broadcast %10 : vector<1x16xf32> to vector<8x16xf32>
    %12 = arith.addf %9, %11 : vector<8x16xf32>
    %cst_11 = arith.constant 0.000000e+00 : f32
    %13 = vector.broadcast %cst_11 : f32 to vector<8x16xf32>
    %14 = arith.maximumf %12, %13 : vector<8x16xf32>
    %c0_12 = arith.constant 0 : index
    %c0_13 = arith.constant 0 : index
    %15 = vector.load %arg6[%c0_12, %c0_13] : memref<16x16xf32, #tpu.memory_space<vmem>>, vector<16x16xf32>
    %cst_14 = arith.constant dense<0.000000e+00> : vector<8x16xf32>
    %16 = tpu.matmul %14, %15, %cst_14 {dimension_numbers = #tpu.dot_dimension_numbers<[1], [0], [0], [1], [0, 0, 1, 1], [], []>, precision = #tpu.contract_precision<fp32>} : vector<8x16xf32>, vector<16x16xf32>, vector<8x16xf32> -> vector<8x16xf32>
    %c0_15 = arith.constant 0 : index
    %c0_16 = arith.constant 0 : index
    %17 = vector.load %arg7[%c0_15, %c0_16] : memref<1x16xf32, #tpu.memory_space<vmem>>, vector<1x16xf32>
    %18 = vector.broadcast %17 : vector<1x16xf32> to vector<8x16xf32>
    %19 = arith.addf %16, %18 : vector<8x16xf32>
    %cst_17 = arith.constant 0.000000e+00 : f32
    %20 = vector.broadcast %cst_17 : f32 to vector<8x16xf32>
    %21 = arith.maximumf %19, %20 : vector<8x16xf32>
    %c0_18 = arith.constant 0 : index
    %c0_19 = arith.constant 0 : index
    %22 = vector.load %arg8[%c0_18, %c0_19] : memref<1x16xf32, #tpu.memory_space<vmem>>, vector<1x16xf32>
    %23 = vector.broadcast %22 : vector<1x16xf32> to vector<8x16xf32>
    %24 = arith.addf %21, %23 : vector<8x16xf32>
    %cst_20 = arith.constant dense<0xFF800000> : vector<8xf32>
    %25 = vector.multi_reduction <maximumf>, %24, %cst_20 [1] : vector<8x16xf32> to vector<8xf32>
    %26 = vector.shape_cast %25 : vector<8xf32> to vector<8x1xf32>
    %27 = vector.broadcast %26 : vector<8x1xf32> to vector<8x16xf32>
    %28 = arith.subf %24, %27 : vector<8x16xf32>
    %29 = math.exp %28 : vector<8x16xf32>
    %cst_21 = arith.constant dense<0.000000e+00> : vector<8xf32>
    %30 = vector.multi_reduction <add>, %29, %cst_21 [1] : vector<8x16xf32> to vector<8xf32>
    %31 = vector.shape_cast %30 : vector<8xf32> to vector<8x1xf32>
    %32 = math.log %31 : vector<8x1xf32>
    %33 = vector.broadcast %32 : vector<8x1xf32> to vector<8x16xf32>
    %34 = arith.subf %28, %33 : vector<8x16xf32>
    %c0_22 = arith.constant 0 : index
    %c0_23 = arith.constant 0 : index
    %35 = vector.load %arg9[%c0_22, %c0_23] : memref<8x16xf32, #tpu.memory_space<vmem>>, vector<8x16xf32>
    tpu.vector_store %arg9[%c0_22, %c0_23], %34 {strides = array<i32>} : memref<8x16xf32, #tpu.memory_space<vmem>>, vector<8x16xf32>,
    return
  }
  func.func @transform_0(%arg0: i32) -> (i32, i32) {
    %c0_i32 = arith.constant 0 : i32
    %c0_i32_0 = arith.constant 0 : i32
    return %arg0, %c0_i32 : i32, i32
  }
  func.func @transform_1(%arg0: i32) -> (i32, i32) {
    %c0_i32 = arith.constant 0 : i32
    %c0_i32_0 = arith.constant 0 : i32
    %c0_i32_1 = arith.constant 0 : i32
    return %c0_i32, %c0_i32_0 : i32, i32
  }
  func.func @transform_2(%arg0: i32) -> (i32, i32) {
    %c0_i32 = arith.constant 0 : i32
    %c0_i32_0 = arith.constant 0 : i32
    %c0_i32_1 = arith.constant 0 : i32
    return %c0_i32, %c0_i32_0 : i32, i32
  }
  func.func @transform_3(%arg0: i32) -> (i32, i32) {
    %c0_i32 = arith.constant 0 : i32
    %c0_i32_0 = arith.constant 0 : i32
    %c0_i32_1 = arith.constant 0 : i32
    return %c0_i32, %c0_i32_0 : i32, i32
  }
  func.func @transform_4(%arg0: i32) -> (i32, i32) {
    %c0_i32 = arith.constant 0 : i32
    %c0_i32_0 = arith.constant 0 : i32
    %c0_i32_1 = arith.constant 0 : i32
    return %c0_i32, %c0_i32_0 : i32, i32
  }
  func.func @transform_5(%arg0: i32) -> (i32, i32) {
    %c0_i32 = arith.constant 0 : i32
    %c0_i32_0 = arith.constant 0 : i32
    %c0_i32_1 = arith.constant 0 : i32
    return %c0_i32, %c0_i32_0 : i32, i32
  }
  func.func @transform_6(%arg0: i32) -> (i32, i32) {
    %c0_i32 = arith.constant 0 : i32
    %c0_i32_0 = arith.constant 0 : i32
    %c0_i32_1 = arith.constant 0 : i32
    return %c0_i32, %c0_i32_0 : i32, i32
  }
  func.func @transform_7(%arg0: i32) -> (i32, i32) {
    %c0_i32 = arith.constant 0 : i32
    %c0_i32_0 = arith.constant 0 : i32
    %c0_i32_1 = arith.constant 0 : i32
    return %c0_i32, %c0_i32_0 : i32, i32
  }
  func.func @transform_8(%arg0: i32) -> (i32, i32) {
    %c0_i32 = arith.constant 0 : i32
    %c0_i32_0 = arith.constant 0 : i32
    return %arg0, %c0_i32 : i32, i32
  }
}

</mosaic_0001>

<llo_original>
// kernel: tpu_custom_call.1
$region0: #{tpu_custom_call.1}
  #allocation0 [shape = 'u32[]', space=smem, size = 0x4, offset = 0x4, fixed_abs, tag = 'smem constant byte address 0x4 - core index']
  #allocation1 [shape = 'u32[144,128]{1,0:T(1,128)}', space=vmem, size = 0x12000, scoped, tag = 'internal scratch']
  %s0 = inlined_call_operand.vmem [shape: f32[8,256], index: 0, kind: input, shape index: {}]
  %s1 = inlined_call_operand.vmem [shape: f32[256,64], index: 1, kind: input, shape index: {}]
  %s2 = inlined_call_operand.vmem [shape: f32[1,64], index: 2, kind: input, shape index: {}]
  %s3 = inlined_call_operand.vmem [shape: f32[64,16], index: 3, kind: input, shape index: {}]
  %s4 = inlined_call_operand.vmem [shape: f32[1,16], index: 4, kind: input, shape index: {}]
  %s5 = inlined_call_operand.vmem [shape: f32[16,16], index: 5, kind: input, shape index: {}]
  %s6 = inlined_call_operand.vmem [shape: f32[1,16], index: 6, kind: input, shape index: {}]
  %s7 = inlined_call_operand.vmem [shape: f32[1,16], index: 7, kind: input, shape index: {}]
  %s8 = inlined_call_operand.hbm [shape: f32[8,16], index: 8, kind: output, shape index: {}]
  %s9 = sld [smem:[#allocation0]]
  $region42: #{tpu_custom_call.1} parent=0
    _
  %s11 = ssub.s32 1, %s9
  %s12 = scalar_select 0, %s11, %s9
  $region1: #{tpu_custom_call.1} parent=0
    #allocation2 [shape = 'u8[4096]{0}', space=vmem, size = 0x1000, scoped, tag = 'output window, operand 0, single buffered']
    #allocation3 [shape = 's32[1]{0}', space=sflag, size = 0x4, scoped, tag = 'scoped memory for tpu_custom_call.1']
    %13 = vsyncpa [#allocation3], 0
    // Predicated region
    $region2: #{tpu_custom_call.1} parent=1 // pred_check
      _
    $region3: #{tpu_custom_call.1} parent=1 // pred_check_branch
      %15 = sbr.rel (0) target = $region5
    $region4: #{tpu_custom_call.1} parent=1 // pred_region
      _
    $region5: #{tpu_custom_call.1} parent=1 // pred_fallthru
      _
    // Predicated region
    $region6: #{tpu_custom_call.1} parent=1 // pred_check
      _
    $region7: #{tpu_custom_call.1} parent=1 // pred_check_branch
      %17 = sbr.rel (0) target = $region9
    $region8: #{tpu_custom_call.1} parent=1 // pred_region
      _
    $region9: #{tpu_custom_call.1} parent=1 // pred_fallthru
      _
    // Predicated region
    $region10: #{tpu_custom_call.1} parent=1 // pred_check
      _
    $region11: #{tpu_custom_call.1} parent=1 // pred_check_branch
      %19 = sbr.rel (0) target = $region13
    $region12: #{tpu_custom_call.1} parent=1 // pred_region
      _
    $region13: #{tpu_custom_call.1} parent=1 // pred_fallthru
      _
    // Predicated region
    $region14: #{tpu_custom_call.1} parent=1 // pred_check
      _
    $region15: #{tpu_custom_call.1} parent=1 // pred_check_branch
      %21 = sbr.rel (0) target = $region17
    $region16: #{tpu_custom_call.1} parent=1 // pred_region
      _
    $region17: #{tpu_custom_call.1} parent=1 // pred_fallthru
      _
    // Predicated region
    $region18: #{tpu_custom_call.1} parent=1 // pred_check
      _
    $region19: #{tpu_custom_call.1} parent=1 // pred_check_branch
      %23 = sbr.rel (0) target = $region21
    $region20: #{tpu_custom_call.1} parent=1 // pred_region
      _
    $region21: #{tpu_custom_call.1} parent=1 // pred_fallthru
      _
    // Predicated region
    $region22: #{tpu_custom_call.1} parent=1 // pred_check
      _
    $region23: #{tpu_custom_call.1} parent=1 // pred_check_branch
      %25 = sbr.rel (0) target = $region25
    $region24: #{tpu_custom_call.1} parent=1 // pred_region
      _
    $region25: #{tpu_custom_call.1} parent=1 // pred_fallthru
      _
    // Predicated region
    $region26: #{tpu_custom_call.1} parent=1 // pred_check
      _
    $region27: #{tpu_custom_call.1} parent=1 // pred_check_branch
      %27 = sbr.rel (0) target = $region29
    $region28: #{tpu_custom_call.1} parent=1 // pred_region
      _
    $region29: #{tpu_custom_call.1} parent=1 // pred_fallthru
      _
    // Predicated region
    $region30: #{tpu_custom_call.1} parent=1 // pred_check
      _
    $region31: #{tpu_custom_call.1} parent=1 // pred_check_branch
      %29 = sbr.rel (0) target = $region33
    $region32: #{tpu_custom_call.1} parent=1 // pred_region
      _
    $region33: #{tpu_custom_call.1} parent=1 // pred_fallthru
      _
    %v30 = vld [vmem:[%s0] sm:$0xff]
    %v31 = vld [vmem:[%s0 + $0x8] sm:$0xff]
    %v32 = vld [vmem:[%s1] sm:$0xff]
    %v33 = vld [vmem:[%s1 + $0x8] sm:$0xff]
    %v34 = vld [vmem:[%s1 + $0x10] sm:$0xff]
    %v35 = vld [vmem:[%s1 + $0x18] sm:$0xff]
    %v36 = vld [vmem:[%s1 + $0x20] sm:$0xff]
    %v37 = vld [vmem:[%s1 + $0x28] sm:$0xff]
    %v38 = vld [vmem:[%s1 + $0x30] sm:$0xff]
    %v39 = vld [vmem:[%s1 + $0x38] sm:$0xff]
    %v40 = vld [vmem:[%s1 + $0x40] sm:$0xff]
    %v41 = vld [vmem:[%s1 + $0x48] sm:$0xff]
    %v42 = vld [vmem:[%s1 + $0x50] sm:$0xff]
    %v43 = vld [vmem:[%s1 + $0x58] sm:$0xff]
    %v44 = vld [vmem:[%s1 + $0x60] sm:$0xff]
    %v45 = vld [vmem:[%s1 + $0x68] sm:$0xff]
    %v46 = vld [vmem:[%s1 + $0x70] sm:$0xff]
    %v47 = vld [vmem:[%s1 + $0x78] sm:$0xff]
    %v48 = vld [vmem:[%s1 + $0x80] sm:$0xff]
    %v49 = vld [vmem:[%s1 + $0x88] sm:$0xff]
    %v50 = vld [vmem:[%s1 + $0x90] sm:$0xff]
    %v51 = vld [vmem:[%s1 + $0x98] sm:$0xff]
    %v52 = vld [vmem:[%s1 + $0xa0] sm:$0xff]
    %v53 = vld [vmem:[%s1 + $0xa8] sm:$0xff]
    %v54 = vld [vmem:[%s1 + $0xb0] sm:$0xff]
    %v55 = vld [vmem:[%s1 + $0xb8] sm:$0xff]
    %v56 = vld [vmem:[%s1 + $0xc0] sm:$0xff]
    %v57 = vld [vmem:[%s1 + $0xc8] sm:$0xff]
    %v58 = vld [vmem:[%s1 + $0xd0] sm:$0xff]
    %v59 = vld [vmem:[%s1 + $0xd8] sm:$0xff]
    %v60 = vld [vmem:[%s1 + $0xe0] sm:$0xff]
    %v61 = vld [vmem:[%s1 + $0xe8] sm:$0xff]
    %v62 = vld [vmem:[%s1 + $0xf0] sm:$0xff]
    %v63 = vld [vmem:[%s1 + $0xf8] sm:$0xff]
    %v64 = vld [vmem:[%s2] sm:$0x1]
    %v66 = vlaneseq
    %v67 = vshrl.u32 %v66, 7
    %v68 = vsub.s32 0, %v67
    %v69 = vrot.slane %v64, %v68
    %71 = vmatprep.subr.mxu0 0.0
    %v72 = vand.u32 %v47, 4294901760
    %73 = vmatpush1.msra.mxu0 %v72
    %74 = vmatprep.subr.mxu0 0.0
    %v75 = vand.u32 %v46, 4294901760
    %76 = vmatpush1.msra.mxu0 %v75
    %77 = vmatprep.subr.mxu0 0.0
    %v78 = vand.u32 %v45, 4294901760
    %79 = vmatpush1.msra.mxu0 %v78
    %80 = vmatprep.subr.mxu0 0.0
    %v81 = vand.u32 %v44, 4294901760
    %82 = vmatpush1.msra.mxu0 %v81
    %83 = vmatprep.subr.mxu0 0.0
    %v84 = vand.u32 %v43, 4294901760
    %85 = vmatpush1.msra.mxu0 %v84
    %86 = vmatprep.subr.mxu0 0.0
    %v87 = vand.u32 %v42, 4294901760
    %88 = vmatpush1.msra.mxu0 %v87
    %89 = vmatprep.subr.mxu0 0.0
    %v90 = vand.u32 %v41, 4294901760
    %91 = vmatpush1.msra.mxu0 %v90
    %92 = vmatprep.subr.mxu0 0.0
    %v93 = vand.u32 %v40, 4294901760
    %94 = vmatpush1.msra.mxu0 %v93
    %95 = vmatprep.subr.mxu0 0.0
    %v96 = vand.u32 %v39, 4294901760
    %97 = vmatpush1.msra.mxu0 %v96
    %98 = vmatprep.subr.mxu0 0.0
    %v99 = vand.u32 %v38, 4294901760
    %100 = vmatpush1.msra.mxu0 %v99
    %101 = vmatprep.subr.mxu0 0.0
    %v102 = vand.u32 %v37, 4294901760
    %103 = vmatpush1.msra.mxu0 %v102
    %104 = vmatprep.subr.mxu0 0.0
    %v105 = vand.u32 %v36, 4294901760
    %106 = vmatpush1.msra.mxu0 %v105
    %107 = vmatprep.subr.mxu0 0.0
    %v108 = vand.u32 %v35, 4294901760
    %109 = vmatpush1.msra.mxu0 %v108
    %110 = vmatprep.subr.mxu0 0.0
    %v111 = vand.u32 %v34, 4294901760
    %112 = vmatpush1.msra.mxu0 %v111
    %113 = vmatprep.subr.mxu0 0.0
    %v114 = vand.u32 %v33, 4294901760
    %115 = vmatpush1.msra.mxu0 %v114
    %116 = vmatprep.subr.mxu0 0.0
    %v117 = vand.u32 %v32, 4294901760
    %118 = vmatpush1.msra.mxu0 %v117
    %119 = vmatprep.subr.mxu0 0.0
    %v120 = vand.u32 %v63, 4294901760
    %121 = vmatpush2.msra.mxu0 %v120
    %122 = vmatprep.subr.mxu0 0.0
    %v123 = vand.u32 %v62, 4294901760
    %124 = vmatpush2.msra.mxu0 %v123
    %125 = vmatprep.subr.mxu0 0.0
    %v126 = vand.u32 %v61, 4294901760
    %127 = vmatpush2.msra.mxu0 %v126
    %128 = vmatprep.subr.mxu0 0.0
    %v129 = vand.u32 %v60, 4294901760
    %130 = vmatpush2.msra.mxu0 %v129
    %131 = vmatprep.subr.mxu0 0.0
    %v132 = vand.u32 %v59, 4294901760
    %133 = vmatpush2.msra.mxu0 %v132
    %134 = vmatprep.subr.mxu0 0.0
    %v135 = vand.u32 %v58, 4294901760
    %136 = vmatpush2.msra.mxu0 %v135
    %137 = vmatprep.subr.mxu0 0.0
    %v138 = vand.u32 %v57, 4294901760
    %139 = vmatpush2.msra.mxu0 %v138
    %140 = vmatprep.subr.mxu0 0.0
    %v141 = vand.u32 %v56, 4294901760
    %142 = vmatpush2.msra.mxu0 %v141
    %143 = vmatprep.subr.mxu0 0.0
    %v144 = vand.u32 %v55, 4294901760
    %145 = vmatpush2.msra.mxu0 %v144
    %146 = vmatprep.subr.mxu0 0.0
    %v147 = vand.u32 %v54, 4294901760
    %148 = vmatpush2.msra.mxu0 %v147
    %149 = vmatprep.subr.mxu0 0.0
    %v150 = vand.u32 %v53, 4294901760
    %151 = vmatpush2.msra.mxu0 %v150
    %152 = vmatprep.subr.mxu0 0.0
    %v153 = vand.u32 %v52, 4294901760
    %154 = vmatpush2.msra.mxu0 %v153
    %155 = vmatprep.subr.mxu0 0.0
    %v156 = vand.u32 %v51, 4294901760
    %157 = vmatpush2.msra.mxu0 %v156
    %158 = vmatprep.subr.mxu0 0.0
    %v159 = vand.u32 %v50, 4294901760
    %160 = vmatpush2.msra.mxu0 %v159
    %161 = vmatprep.subr.mxu0 0.0
    %v162 = vand.u32 %v49, 4294901760
    %163 = vmatpush2.msra.mxu0 %v162
    %164 = vmatprep.subr.mxu0 0.0
    %v165 = vand.u32 %v48, 4294901760
    %166 = vmatpush2.msra.mxu0 %v165
    %v167 = vand.u32 %v31, 4294901760
    %v168 = vsub.f32 %v31, %v167
    %v169 = vand.u32 %v168, 4294901760
    %v170 = vsub.f32 %v168, %v169
    %v171 = vand.u32 %v170, 4294901760
    %172 = vmatprep.mubr.f32.mxu0 %v171
    %v173 = vand.u32 %v30, 4294901760
    %v174 = vsub.f32 %v30, %v173
    %v175 = vand.u32 %v174, 4294901760
    %v176 = vsub.f32 %v174, %v175
    %v177 = vand.u32 %v176, 4294901760
    %178 = vmatmul.mubr.f32.gmra.mxu0 %v177
    %v179 = vpop.f32.mrf.mxu0
    %v180 = vadd.f32 %v69, %v179
    %v181 = vpop.f32.mrf.mxu0
    %182 = vdwg.mxu0
    %183 = vmatprep.subr.mxu0 0.0
    %v184 = vand.u32 %v47, 4294901760
    %v185 = vsub.f32 %v47, %v184
    %v186 = vand.u32 %v185, 4294901760
    %v187 = vsub.f32 %v185, %v186
    %v188 = vand.u32 %v187, 4294901760
    %189 = vmatpush1.msra.mxu0 %v188
    %190 = vmatprep.subr.mxu0 0.0
    %v191 = vand.u32 %v46, 4294901760
    %v192 = vsub.f32 %v46, %v191
    %v193 = vand.u32 %v192, 4294901760
    %v194 = vsub.f32 %v192, %v193
    %v195 = vand.u32 %v194, 4294901760
    %196 = vmatpush1.msra.mxu0 %v195
    %197 = vmatprep.subr.mxu0 0.0
    %v198 = vand.u32 %v45, 4294901760
    %v199 = vsub.f32 %v45, %v198
    %v200 = vand.u32 %v199, 4294901760
    %v201 = vsub.f32 %v199, %v200
    %v202 = vand.u32 %v201, 4294901760
    %203 = vmatpush1.msra.mxu0 %v202
    %204 = vmatprep.subr.mxu0 0.0
    %v205 = vand.u32 %v44, 4294901760
    %v206 = vsub.f32 %v44, %v205
    %v207 = vand.u32 %v206, 4294901760
    %v208 = vsub.f32 %v206, %v207
    %v209 = vand.u32 %v208, 4294901760
    %210 = vmatpush1.msra.mxu0 %v209
    %211 = vmatprep.subr.mxu0 0.0
    %v212 = vand.u32 %v43, 4294901760
    %v213 = vsub.f32 %v43, %v212
    %v214 = vand.u32 %v213, 4294901760
    %v215 = vsub.f32 %v213, %v214
    %v216 = vand.u32 %v215, 4294901760
    %217 = vmatpush1.msra.mxu0 %v216
    %218 = vmatprep.subr.mxu0 0.0
    %v219 = vand.u32 %v42, 4294901760
    %v220 = vsub.f32 %v42, %v219
    %v221 = vand.u32 %v220, 4294901760
    %v222 = vsub.f32 %v220, %v221
    %v223 = vand.u32 %v222, 4294901760
    %224 = vmatpush1.msra.mxu0 %v223
    %225 = vmatprep.subr.mxu0 0.0
    %v226 = vand.u32 %v41, 4294901760
    %v227 = vsub.f32 %v41, %v226
    %v228 = vand.u32 %v227, 4294901760
    %v229 = vsub.f32 %v227, %v228
    %v230 = vand.u32 %v229, 4294901760
    %231 = vmatpush1.msra.mxu0 %v230
    %232 = vmatprep.subr.mxu0 0.0
    %v233 = vand.u32 %v40, 4294901760
    %v234 = vsub.f32 %v40, %v233
    %v235 = vand.u32 %v234, 4294901760
    %v236 = vsub.f32 %v234, %v235
    %v237 = vand.u32 %v236, 4294901760
    %238 = vmatpush1.msra.mxu0 %v237
    %239 = vmatprep.subr.mxu0 0.0
    %v240 = vand.u32 %v39, 4294901760
    %v241 = vsub.f32 %v39, %v240
    %v242 = vand.u32 %v241, 4294901760
    %v243 = vsub.f32 %v241, %v242
    %v244 = vand.u32 %v243, 4294901760
    %245 = vmatpush1.msra.mxu0 %v244
    %246 = vmatprep.subr.mxu0 0.0
    %v247 = vand.u32 %v38, 4294901760
    %v248 = vsub.f32 %v38, %v247
    %v249 = vand.u32 %v248, 4294901760
    %v250 = vsub.f32 %v248, %v249
    %v251 = vand.u32 %v250, 4294901760
    %252 = vmatpush1.msra.mxu0 %v251
    %253 = vmatprep.subr.mxu0 0.0
    %v254 = vand.u32 %v37, 4294901760
    %v255 = vsub.f32 %v37, %v254
    %v256 = vand.u32 %v255, 4294901760
    %v257 = vsub.f32 %v255, %v256
    %v258 = vand.u32 %v257, 4294901760
    %259 = vmatpush1.msra.mxu0 %v258
    %260 = vmatprep.subr.mxu0 0.0
    %v261 = vand.u32 %v36, 4294901760
    %v262 = vsub.f32 %v36, %v261
    %v263 = vand.u32 %v262, 4294901760
    %v264 = vsub.f32 %v262, %v263
    %v265 = vand.u32 %v264, 4294901760
    %266 = vmatpush1.msra.mxu0 %v265
    %267 = vmatprep.subr.mxu0 0.0
    %v268 = vand.u32 %v35, 4294901760
    %v269 = vsub.f32 %v35, %v268
    %v270 = vand.u32 %v269, 4294901760
    %v271 = vsub.f32 %v269, %v270
    %v272 = vand.u32 %v271, 4294901760
    %273 = vmatpush1.msra.mxu0 %v272
    %274 = vmatprep.subr.mxu0 0.0
    %v275 = vand.u32 %v34, 4294901760
    %v276 = vsub.f32 %v34, %v275
    %v277 = vand.u32 %v276, 4294901760
    %v278 = vsub.f32 %v276, %v277
    %v279 = vand.u32 %v278, 4294901760
    %280 = vmatpush1.msra.mxu0 %v279
    %281 = vmatprep.subr.mxu0 0.0
    %v282 = vand.u32 %v33, 4294901760
    %v283 = vsub.f32 %v33, %v282
    %v284 = vand.u32 %v283, 4294901760
    %v285 = vsub.f32 %v283, %v284
    %v286 = vand.u32 %v285, 4294901760
    %287 = vmatpush1.msra.mxu0 %v286
    %288 = vmatprep.subr.mxu0 0.0
    %v289 = vand.u32 %v32, 4294901760
    %v290 = vsub.f32 %v32, %v289
    %v291 = vand.u32 %v290, 4294901760
    %v292 = vsub.f32 %v290, %v291
    %v293 = vand.u32 %v292, 4294901760
    %294 = vmatpush1.msra.mxu0 %v293
    %295 = vmatprep.subr.mxu0 0.0
    %v296 = vand.u32 %v63, 4294901760
    %v297 = vsub.f32 %v63, %v296
    %v298 = vand.u32 %v297, 4294901760
    %v299 = vsub.f32 %v297, %v298
    %v300 = vand.u32 %v299, 4294901760
    %301 = vmatpush2.msra.mxu0 %v300
    %302 = vmatprep.subr.mxu0 0.0
    %v303 = vand.u32 %v62, 4294901760
    %v304 = vsub.f32 %v62, %v303
    %v305 = vand.u32 %v304, 4294901760
    %v306 = vsub.f32 %v304, %v305
    %v307 = vand.u32 %v306, 4294901760
    %308 = vmatpush2.msra.mxu0 %v307
    %309 = vmatprep.subr.mxu0 0.0
    %v310 = vand.u32 %v61, 4294901760
    %v311 = vsub.f32 %v61, %v310
    %v312 = vand.u32 %v311, 4294901760
    %v313 = vsub.f32 %v311, %v312
    %v314 = vand.u32 %v313, 4294901760
    %315 = vmatpush2.msra.mxu0 %v314
    %316 = vmatprep.subr.mxu0 0.0
    %v317 = vand.u32 %v60, 4294901760
    %v318 = vsub.f32 %v60, %v317
    %v319 = vand.u32 %v318, 4294901760
    %v320 = vsub.f32 %v318, %v319
    %v321 = vand.u32 %v320, 4294901760
    %322 = vmatpush2.msra.mxu0 %v321
    %323 = vmatprep.subr.mxu0 0.0
    %v324 = vand.u32 %v59, 4294901760
    %v325 = vsub.f32 %v59, %v324
    %v326 = vand.u32 %v325, 4294901760
    %v327 = vsub.f32 %v325, %v326
    %v328 = vand.u32 %v327, 4294901760
    %329 = vmatpush2.msra.mxu0 %v328
    %330 = vmatprep.subr.mxu0 0.0
    %v331 = vand.u32 %v58, 4294901760
    %v332 = vsub.f32 %v58, %v331
    %v333 = vand.u32 %v332, 4294901760
    %v334 = vsub.f32 %v332, %v333
    %v335 = vand.u32 %v334, 4294901760
    %336 = vmatpush2.msra.mxu0 %v335
    %337 = vmatprep.subr.mxu0 0.0
    %v338 = vand.u32 %v57, 4294901760
    %v339 = vsub.f32 %v57, %v338
    %v340 = vand.u32 %v339, 4294901760
    %v341 = vsub.f32 %v339, %v340
    %v342 = vand.u32 %v341, 4294901760
    %343 = vmatpush2.msra.mxu0 %v342
    %344 = vmatprep.subr.mxu0 0.0
    %v345 = vand.u32 %v56, 4294901760
    %v346 = vsub.f32 %v56, %v345
    %v347 = vand.u32 %v346, 4294901760
    %v348 = vsub.f32 %v346, %v347
    %v349 = vand.u32 %v348, 4294901760
    %350 = vmatpush2.msra.mxu0 %v349
    %351 = vmatprep.subr.mxu0 0.0
    %v352 = vand.u32 %v55, 4294901760
    %v353 = vsub.f32 %v55, %v352
    %v354 = vand.u32 %v353, 4294901760
    %v355 = vsub.f32 %v353, %v354
    %v356 = vand.u32 %v355, 4294901760
    %357 = vmatpush2.msra.mxu0 %v356
    %358 = vmatprep.subr.mxu0 0.0
    %v359 = vand.u32 %v54, 4294901760
    %v360 = vsub.f32 %v54, %v359
    %v361 = vand.u32 %v360, 4294901760
    %v362 = vsub.f32 %v360, %v361
    %v363 = vand.u32 %v362, 4294901760
    %364 = vmatpush2.msra.mxu0 %v363
    %365 = vmatprep.subr.mxu0 0.0
    %v366 = vand.u32 %v53, 4294901760
    %v367 = vsub.f32 %v53, %v366
    %v368 = vand.u32 %v367, 4294901760
    %v369 = vsub.f32 %v367, %v368
    %v370 = vand.u32 %v369, 4294901760
    %371 = vmatpush2.msra.mxu0 %v370
    %372 = vmatprep.subr.mxu0 0.0
    %v373 = vand.u32 %v52, 4294901760
    %v374 = vsub.f32 %v52, %v373
    %v375 = vand.u32 %v374, 4294901760
    %v376 = vsub.f32 %v374, %v375
    %v377 = vand.u32 %v376, 4294901760
    %378 = vmatpush2.msra.mxu0 %v377
    %379 = vmatprep.subr.mxu0 0.0
    %v380 = vand.u32 %v51, 4294901760
    %v381 = vsub.f32 %v51, %v380
    %v382 = vand.u32 %v381, 4294901760
    %v383 = vsub.f32 %v381, %v382
    %v384 = vand.u32 %v383, 4294901760
    %385 = vmatpush2.msra.mxu0 %v384
    %386 = vmatprep.subr.mxu0 0.0
    %v387 = vand.u32 %v50, 4294901760
    %v388 = vsub.f32 %v50, %v387
    %v389 = vand.u32 %v388, 4294901760
    %v390 = vsub.f32 %v388, %v389
    %v391 = vand.u32 %v390, 4294901760
    %392 = vmatpush2.msra.mxu0 %v391
    %393 = vmatprep.subr.mxu0 0.0
    %v394 = vand.u32 %v49, 4294901760
    %v395 = vsub.f32 %v49, %v394
    %v396 = vand.u32 %v395, 4294901760
    %v397 = vsub.f32 %v395, %v396
    %v398 = vand.u32 %v397, 4294901760
    %399 = vmatpush2.msra.mxu0 %v398
    %400 = vmatprep.subr.mxu0 0.0
    %v401 = vand.u32 %v48, 4294901760
    %v402 = vsub.f32 %v48, %v401
    %v403 = vand.u32 %v402, 4294901760
    %v404 = vsub.f32 %v402, %v403
    %v405 = vand.u32 %v404, 4294901760
    %406 = vmatpush2.msra.mxu0 %v405
    %v407 = vand.u32 %v31, 4294901760
    %408 = vmatprep.mubr.f32.mxu0 %v407
    %v409 = vand.u32 %v30, 4294901760
    %410 = vmatmul.mubr.f32.gmra.mxu0 %v409
    %v411 = vpop.f32.mrf.mxu0
    %v412 = vadd.f32 %v180, %v411
    %v413 = vpop.f32.mrf.mxu0
    %414 = vdwg.mxu0
    %415 = vmatprep.subr.mxu0 0.0
    %v416 = vand.u32 %v47, 4294901760
    %v417 = vsub.f32 %v47, %v416
    %418 = vmatpush1.msra.mxu0 %v417
    %419 = vmatprep.subr.mxu0 0.0
    %v420 = vand.u32 %v46, 4294901760
    %v421 = vsub.f32 %v46, %v420
    %422 = vmatpush1.msra.mxu0 %v421
    %423 = vmatprep.subr.mxu0 0.0
    %v424 = vand.u32 %v45, 4294901760
    %v425 = vsub.f32 %v45, %v424
    %426 = vmatpush1.msra.mxu0 %v425
    %427 = vmatprep.subr.mxu0 0.0
    %v428 = vand.u32 %v44, 4294901760
    %v429 = vsub.f32 %v44, %v428
    %430 = vmatpush1.msra.mxu0 %v429
    %431 = vmatprep.subr.mxu0 0.0
    %v432 = vand.u32 %v43, 4294901760
    %v433 = vsub.f32 %v43, %v432
    %434 = vmatpush1.msra.mxu0 %v433
    %435 = vmatprep.subr.mxu0 0.0
    %v436 = vand.u32 %v42, 4294901760
    %v437 = vsub.f32 %v42, %v436
    %438 = vmatpush1.msra.mxu0 %v437
    %439 = vmatprep.subr.mxu0 0.0
    %v440 = vand.u32 %v41, 4294901760
    %v441 = vsub.f32 %v41, %v440
    %442 = vmatpush1.msra.mxu0 %v441
    %443 = vmatprep.subr.mxu0 0.0
    %v444 = vand.u32 %v40, 4294901760
    %v445 = vsub.f32 %v40, %v444
    %446 = vmatpush1.msra.mxu0 %v445
    %447 = vmatprep.subr.mxu0 0.0
    %v448 = vand.u32 %v39, 4294901760
    %v449 = vsub.f32 %v39, %v448
    %450 = vmatpush1.msra.mxu0 %v449
    %451 = vmatprep.subr.mxu0 0.0
    %v452 = vand.u32 %v38, 4294901760
    %v453 = vsub.f32 %v38, %v452
    %454 = vmatpush1.msra.mxu0 %v453
    %455 = vmatprep.subr.mxu0 0.0
    %v456 = vand.u32 %v37, 4294901760
    %v457 = vsub.f32 %v37, %v456
    %458 = vmatpush1.msra.mxu0 %v457
    %459 = vmatprep.subr.mxu0 0.0
    %v460 = vand.u32 %v36, 4294901760
    %v461 = vsub.f32 %v36, %v460
    %462 = vmatpush1.msra.mxu0 %v461
    %463 = vmatprep.subr.mxu0 0.0
    %v464 = vand.u32 %v35, 4294901760
    %v465 = vsub.f32 %v35, %v464
    %466 = vmatpush1.msra.mxu0 %v465
    %467 = vmatprep.subr.mxu0 0.0
    %v468 = vand.u32 %v34, 4294901760
    %v469 = vsub.f32 %v34, %v468
    %470 = vmatpush1.msra.mxu0 %v469
    %471 = vmatprep.subr.mxu0 0.0
    %v472 = vand.u32 %v33, 4294901760
    %v473 = vsub.f32 %v33, %v472
    %474 = vmatpush1.msra.mxu0 %v473
    %475 = vmatprep.subr.mxu0 0.0
    %v476 = vand.u32 %v32, 4294901760
    %v477 = vsub.f32 %v32, %v476
    %478 = vmatpush1.msra.mxu0 %v477
    %479 = vmatprep.subr.mxu0 0.0
    %v480 = vand.u32 %v63, 4294901760
    %v481 = vsub.f32 %v63, %v480
    %482 = vmatpush2.msra.mxu0 %v481
    %483 = vmatprep.subr.mxu0 0.0
    %v484 = vand.u32 %v62, 4294901760
    %v485 = vsub.f32 %v62, %v484
    %486 = vmatpush2.msra.mxu0 %v485
    %487 = vmatprep.subr.mxu0 0.0
    %v488 = vand.u32 %v61, 4294901760
    %v489 = vsub.f32 %v61, %v488
    %490 = vmatpush2.msra.mxu0 %v489
    %491 = vmatprep.subr.mxu0 0.0
    %v492 = vand.u32 %v60, 4294901760
    %v493 = vsub.f32 %v60, %v492
    %494 = vmatpush2.msra.mxu0 %v493
    %495 = vmatprep.subr.mxu0 0.0
    %v496 = vand.u32 %v59, 4294901760
    %v497 = vsub.f32 %v59, %v496
    %498 = vmatpush2.msra.mxu0 %v497
    %499 = vmatprep.subr.mxu0 0.0
    %v500 = vand.u32 %v58, 4294901760
    %v501 = vsub.f32 %v58, %v500
    %502 = vmatpush2.msra.mxu0 %v501
    %503 = vmatprep.subr.mxu0 0.0
    %v504 = vand.u32 %v57, 4294901760
    %v505 = vsub.f32 %v57, %v504
    %506 = vmatpush2.msra.mxu0 %v505
    %507 = vmatprep.subr.mxu0 0.0
    %v508 = vand.u32 %v56, 4294901760
    %v509 = vsub.f32 %v56, %v508
    %510 = vmatpush2.msra.mxu0 %v509
    %511 = vmatprep.subr.mxu0 0.0
    %v512 = vand.u32 %v55, 4294901760
    %v513 = vsub.f32 %v55, %v512
    %514 = vmatpush2.msra.mxu0 %v513
    %515 = vmatprep.subr.mxu0 0.0
    %v516 = vand.u32 %v54, 4294901760
    %v517 = vsub.f32 %v54, %v516
    %518 = vmatpush2.msra.mxu0 %v517
    %519 = vmatprep.subr.mxu0 0.0
    %v520 = vand.u32 %v53, 4294901760
    %v521 = vsub.f32 %v53, %v520
    %522 = vmatpush2.msra.mxu0 %v521
    %523 = vmatprep.subr.mxu0 0.0
    %v524 = vand.u32 %v52, 4294901760
    %v525 = vsub.f32 %v52, %v524
    %526 = vmatpush2.msra.mxu0 %v525
    %527 = vmatprep.subr.mxu0 0.0
    %v528 = vand.u32 %v51, 4294901760
    %v529 = vsub.f32 %v51, %v528
    %530 = vmatpush2.msra.mxu0 %v529
    %531 = vmatprep.subr.mxu0 0.0
    %v532 = vand.u32 %v50, 4294901760
    %v533 = vsub.f32 %v50, %v532
    %534 = vmatpush2.msra.mxu0 %v533
    %535 = vmatprep.subr.mxu0 0.0
    %v536 = vand.u32 %v49, 4294901760
    %v537 = vsub.f32 %v49, %v536
    %538 = vmatpush2.msra.mxu0 %v537
    %539 = vmatprep.subr.mxu0 0.0
    %v540 = vand.u32 %v48, 4294901760
    %v541 = vsub.f32 %v48, %v540
    %542 = vmatpush2.msra.mxu0 %v541
    %v543 = vand.u32 %v31, 4294901760
    %v544 = vsub.f32 %v31, %v543
    %545 = vmatprep.mubr.f32.mxu0 %v544
    %v546 = vand.u32 %v30, 4294901760
    %v547 = vsub.f32 %v30, %v546
    %548 = vmatmul.mubr.f32.gmra.mxu0 %v547
    %v549 = vpop.f32.mrf.mxu0
    %v550 = vadd.f32 %v412, %v549
    %v551 = vpop.f32.mrf.mxu0
    %552 = vdwg.mxu0
    %553 = vmatprep.subr.mxu0 0.0
    %v554 = vand.u32 %v47, 4294901760
    %555 = vmatpush1.msra.mxu0 %v554
    %556 = vmatprep.subr.mxu0 0.0
    %v557 = vand.u32 %v46, 4294901760
    %558 = vmatpush1.msra.mxu0 %v557
    %559 = vmatprep.subr.mxu0 0.0
    %v560 = vand.u32 %v45, 4294901760
    %561 = vmatpush1.msra.mxu0 %v560
    %562 = vmatprep.subr.mxu0 0.0
    %v563 = vand.u32 %v44, 4294901760
    %564 = vmatpush1.msra.mxu0 %v563
    %565 = vmatprep.subr.mxu0 0.0
    %v566 = vand.u32 %v43, 4294901760
    %567 = vmatpush1.msra.mxu0 %v566
    %568 = vmatprep.subr.mxu0 0.0
    %v569 = vand.u32 %v42, 4294901760
    %570 = vmatpush1.msra.mxu0 %v569
    %571 = vmatprep.subr.mxu0 0.0
    %v572 = vand.u32 %v41, 4294901760
    %573 = vmatpush1.msra.mxu0 %v572
    %574 = vmatprep.subr.mxu0 0.0
    %v575 = vand.u32 %v40, 4294901760
    %576 = vmatpush1.msra.mxu0 %v575
    %577 = vmatprep.subr.mxu0 0.0
    %v578 = vand.u32 %v39, 4294901760
    %579 = vmatpush1.msra.mxu0 %v578
    %580 = vmatprep.subr.mxu0 0.0
    %v581 = vand.u32 %v38, 4294901760
    %582 = vmatpush1.msra.mxu0 %v581
    %583 = vmatprep.subr.mxu0 0.0
    %v584 = vand.u32 %v37, 4294901760
    %585 = vmatpush1.msra.mxu0 %v584
    %586 = vmatprep.subr.mxu0 0.0
    %v587 = vand.u32 %v36, 4294901760
    %588 = vmatpush1.msra.mxu0 %v587
    %589 = vmatprep.subr.mxu0 0.0
    %v590 = vand.u32 %v35, 4294901760
    %591 = vmatpush1.msra.mxu0 %v590
    %592 = vmatprep.subr.mxu0 0.0
    %v593 = vand.u32 %v34, 4294901760
    %594 = vmatpush1.msra.mxu0 %v593
    %595 = vmatprep.subr.mxu0 0.0
    %v596 = vand.u32 %v33, 4294901760
    %597 = vmatpush1.msra.mxu0 %v596
    %598 = vmatprep.subr.mxu0 0.0
    %v599 = vand.u32 %v32, 4294901760
    %600 = vmatpush1.msra.mxu0 %v599
    %601 = vmatprep.subr.mxu0 0.0
    %v602 = vand.u32 %v63, 4294901760
    %603 = vmatpush2.msra.mxu0 %v602
    %604 = vmatprep.subr.mxu0 0.0
    %v605 = vand.u32 %v62, 4294901760
    %606 = vmatpush2.msra.mxu0 %v605
    %607 = vmatprep.subr.mxu0 0.0
    %v608 = vand.u32 %v61, 4294901760
    %609 = vmatpush2.msra.mxu0 %v608
    %610 = vmatprep.subr.mxu0 0.0
    %v611 = vand.u32 %v60, 4294901760
    %612 = vmatpush2.msra.mxu0 %v611
    %613 = vmatprep.subr.mxu0 0.0
    %v614 = vand.u32 %v59, 4294901760
    %615 = vmatpush2.msra.mxu0 %v614
    %616 = vmatprep.subr.mxu0 0.0
    %v617 = vand.u32 %v58, 4294901760
    %618 = vmatpush2.msra.mxu0 %v617
    %619 = vmatprep.subr.mxu0 0.0
    %v620 = vand.u32 %v57, 4294901760
    %621 = vmatpush2.msra.mxu0 %v620
    %622 = vmatprep.subr.mxu0 0.0
    %v623 = vand.u32 %v56, 4294901760
    %624 = vmatpush2.msra.mxu0 %v623
    %625 = vmatprep.subr.mxu0 0.0
    %v626 = vand.u32 %v55, 4294901760
    %627 = vmatpush2.msra.mxu0 %v626
    %628 = vmatprep.subr.mxu0 0.0
    %v629 = vand.u32 %v54, 4294901760
    %630 = vmatpush2.msra.mxu0 %v629
    %631 = vmatprep.subr.mxu0 0.0
    %v632 = vand.u32 %v53, 4294901760
    %633 = vmatpush2.msra.mxu0 %v632
    %634 = vmatprep.subr.mxu0 0.0
    %v635 = vand.u32 %v52, 4294901760
    %636 = vmatpush2.msra.mxu0 %v635
    %637 = vmatprep.subr.mxu0 0.0
    %v638 = vand.u32 %v51, 4294901760
    %639 = vmatpush2.msra.mxu0 %v638
    %640 = vmatprep.subr.mxu0 0.0
    %v641 = vand.u32 %v50, 4294901760
    %642 = vmatpush2.msra.mxu0 %v641
    %643 = vmatprep.subr.mxu0 0.0
    %v644 = vand.u32 %v49, 4294901760
    %645 = vmatpush2.msra.mxu0 %v644
    %646 = vmatprep.subr.mxu0 0.0
    %v647 = vand.u32 %v48, 4294901760
    %648 = vmatpush2.msra.mxu0 %v647
    %v649 = vand.u32 %v31, 4294901760
    %v650 = vsub.f32 %v31, %v649
    %v651 = vand.u32 %v650, 4294901760
    %652 = vmatprep.mubr.f32.mxu0 %v651
    %v653 = vand.u32 %v30, 4294901760
    %v654 = vsub.f32 %v30, %v653
    %v655 = vand.u32 %v654, 4294901760
    %656 = vmatmul.mubr.f32.gmra.mxu0 %v655
    %v657 = vpop.f32.mrf.mxu0
    %v658 = vadd.f32 %v550, %v657
    %v659 = vpop.f32.mrf.mxu0
    %660 = vdwg.mxu0
    %661 = vmatprep.subr.mxu0 0.0
    %v662 = vand.u32 %v47, 4294901760
    %v663 = vsub.f32 %v47, %v662
    %v664 = vand.u32 %v663, 4294901760
    %665 = vmatpush1.msra.mxu0 %v664
    %666 = vmatprep.subr.mxu0 0.0
    %v667 = vand.u32 %v46, 4294901760
    %v668 = vsub.f32 %v46, %v667
    %v669 = vand.u32 %v668, 4294901760
    %670 = vmatpush1.msra.mxu0 %v669
    %671 = vmatprep.subr.mxu0 0.0
    %v672 = vand.u32 %v45, 4294901760
    %v673 = vsub.f32 %v45, %v672
    %v674 = vand.u32 %v673, 4294901760
    %675 = vmatpush1.msra.mxu0 %v674
    %676 = vmatprep.subr.mxu0 0.0
    %v677 = vand.u32 %v44, 4294901760
    %v678 = vsub.f32 %v44, %v677
    %v679 = vand.u32 %v678, 4294901760
    %680 = vmatpush1.msra.mxu0 %v679
    %681 = vmatprep.subr.mxu0 0.0
    %v682 = vand.u32 %v43, 4294901760
    %v683 = vsub.f32 %v43, %v682
    %v684 = vand.u32 %v683, 4294901760
    %685 = vmatpush1.msra.mxu0 %v684
    %686 = vmatprep.subr.mxu0 0.0
    %v687 = vand.u32 %v42, 4294901760
    %v688 = vsub.f32 %v42, %v687
    %v689 = vand.u32 %v688, 4294901760
    %690 = vmatpush1.msra.mxu0 %v689
    %691 = vmatprep.subr.mxu0 0.0
    %v692 = vand.u32 %v41, 4294901760
    %v693 = vsub.f32 %v41, %v692
    %v694 = vand.u32 %v693, 4294901760
    %695 = vmatpush1.msra.mxu0 %v694
    %696 = vmatprep.subr.mxu0 0.0
    %v697 = vand.u32 %v40, 4294901760
    %v698 = vsub.f32 %v40, %v697
    %v699 = vand.u32 %v698, 4294901760
    %700 = vmatpush1.msra.mxu0 %v699
    %701 = vmatprep.subr.mxu0 0.0
    %v702 = vand.u32 %v39, 4294901760
    %v703 = vsub.f32 %v39, %v702
    %v704 = vand.u32 %v703, 4294901760
    %705 = vmatpush1.msra.mxu0 %v704
    %706 = vmatprep.subr.mxu0 0.0
    %v707 = vand.u32 %v38, 4294901760
    %v708 = vsub.f32 %v38, %v707
    %v709 = vand.u32 %v708, 4294901760
    %710 = vmatpush1.msra.mxu0 %v709
    %711 = vmatprep.subr.mxu0 0.0
    %v712 = vand.u32 %v37, 4294901760
    %v713 = vsub.f32 %v37, %v712
    %v714 = vand.u32 %v713, 4294901760
    %715 = vmatpush1.msra.mxu0 %v714
    %716 = vmatprep.subr.mxu0 0.0
    %v717 = vand.u32 %v36, 4294901760
    %v718 = vsub.f32 %v36, %v717
    %v719 = vand.u32 %v718, 4294901760
    %720 = vmatpush1.msra.mxu0 %v719
    %721 = vmatprep.subr.mxu0 0.0
    %v722 = vand.u32 %v35, 4294901760
    %v723 = vsub.f32 %v35, %v722
    %v724 = vand.u32 %v723, 4294901760
    %725 = vmatpush1.msra.mxu0 %v724
    %726 = vmatprep.subr.mxu0 0.0
    %v727 = vand.u32 %v34, 4294901760
    %v728 = vsub.f32 %v34, %v727
    %v729 = vand.u32 %v728, 4294901760
    %730 = vmatpush1.msra.mxu0 %v729
    %731 = vmatprep.subr.mxu0 0.0
    %v732 = vand.u32 %v33, 4294901760
    %v733 = vsub.f32 %v33, %v732
    %v734 = vand.u32 %v733, 4294901760
    %735 = vmatpush1.msra.mxu0 %v734
    %736 = vmatprep.subr.mxu0 0.0
    %v737 = vand.u32 %v32, 4294901760
    %v738 = vsub.f32 %v32, %v737
    %v739 = vand.u32 %v738, 4294901760
    %740 = vmatpush1.msra.mxu0 %v739
    %741 = vmatprep.subr.mxu0 0.0
    %v742 = vand.u32 %v63, 4294901760
    %v743 = vsub.f32 %v63, %v742
    %v744 = vand.u32 %v743, 4294901760
    %745 = vmatpush2.msra.mxu0 %v744
    %746 = vmatprep.subr.mxu0 0.0
    %v747 = vand.u32 %v62, 4294901760
    %v748 = vsub.f32 %v62, %v747
    %v749 = vand.u32 %v748, 4294901760
    %750 = vmatpush2.msra.mxu0 %v749
    %751 = vmatprep.subr.mxu0 0.0
    %v752 = vand.u32 %v61, 4294901760
    %v753 = vsub.f32 %v61, %v752
    %v754 = vand.u32 %v753, 4294901760
    %755 = vmatpush2.msra.mxu0 %v754
    %756 = vmatprep.subr.mxu0 0.0
    %v757 = vand.u32 %v60, 4294901760
    %v758 = vsub.f32 %v60, %v757
    %v759 = vand.u32 %v758, 4294901760
    %760 = vmatpush2.msra.mxu0 %v759
    %761 = vmatprep.subr.mxu0 0.0
    %v762 = vand.u32 %v59, 4294901760
    %v763 = vsub.f32 %v59, %v762
    %v764 = vand.u32 %v763, 4294901760
    %765 = vmatpush2.msra.mxu0 %v764
    %766 = vmatprep.subr.mxu0 0.0
    %v767 = vand.u32 %v58, 4294901760
    %v768 = vsub.f32 %v58, %v767
    %v769 = vand.u32 %v768, 4294901760
    %770 = vmatpush2.msra.mxu0 %v769
    %771 = vmatprep.subr.mxu0 0.0
    %v772 = vand.u32 %v57, 4294901760
    %v773 = vsub.f32 %v57, %v772
    %v774 = vand.u32 %v773, 4294901760
    %775 = vmatpush2.msra.mxu0 %v774
    %776 = vmatprep.subr.mxu0 0.0
    %v777 = vand.u32 %v56, 4294901760
    %v778 = vsub.f32 %v56, %v777
    %v779 = vand.u32 %v778, 4294901760
    %780 = vmatpush2.msra.mxu0 %v779
    %781 = vmatprep.subr.mxu0 0.0
    %v782 = vand.u32 %v55, 4294901760
    %v783 = vsub.f32 %v55, %v782
    %v784 = vand.u32 %v783, 4294901760
    %785 = vmatpush2.msra.mxu0 %v784
    %786 = vmatprep.subr.mxu0 0.0
    %v787 = vand.u32 %v54, 4294901760
    %v788 = vsub.f32 %v54, %v787
    %v789 = vand.u32 %v788, 4294901760
    %790 = vmatpush2.msra.mxu0 %v789
    %791 = vmatprep.subr.mxu0 0.0
    %v792 = vand.u32 %v53, 4294901760
    %v793 = vsub.f32 %v53, %v792
    %v794 = vand.u32 %v793, 4294901760
    %795 = vmatpush2.msra.mxu0 %v794
    %796 = vmatprep.subr.mxu0 0.0
    %v797 = vand.u32 %v52, 4294901760
    %v798 = vsub.f32 %v52, %v797
    %v799 = vand.u32 %v798, 4294901760
    %800 = vmatpush2.msra.mxu0 %v799
    %801 = vmatprep.subr.mxu0 0.0
    %v802 = vand.u32 %v51, 4294901760
    %v803 = vsub.f32 %v51, %v802
    %v804 = vand.u32 %v803, 4294901760
    %805 = vmatpush2.msra.mxu0 %v804
    %806 = vmatprep.subr.mxu0 0.0
    %v807 = vand.u32 %v50, 4294901760
    %v808 = vsub.f32 %v50, %v807
    %v809 = vand.u32 %v808, 4294901760
    %810 = vmatpush2.msra.mxu0 %v809
    %811 = vmatprep.subr.mxu0 0.0
    %v812 = vand.u32 %v49, 4294901760
    %v813 = vsub.f32 %v49, %v812
    %v814 = vand.u32 %v813, 4294901760
    %815 = vmatpush2.msra.mxu0 %v814
    %816 = vmatprep.subr.mxu0 0.0
    %v817 = vand.u32 %v48, 4294901760
    %v818 = vsub.f32 %v48, %v817
    %v819 = vand.u32 %v818, 4294901760
    %820 = vmatpush2.msra.mxu0 %v819
    %v821 = vand.u32 %v31, 4294901760
    %822 = vmatprep.mubr.f32.mxu0 %v821
    %v823 = vand.u32 %v30, 4294901760
    %824 = vmatmul.mubr.f32.gmra.mxu0 %v823
    %v825 = vpop.f32.mrf.mxu0
    %v826 = vadd.f32 %v658, %v825
    %v827 = vpop.f32.mrf.mxu0
    %828 = vdwg.mxu0
    %829 = vmatprep.subr.mxu0 0.0
    %v830 = vand.u32 %v47, 4294901760
    %831 = vmatpush1.msra.mxu0 %v830
    %832 = vmatprep.subr.mxu0 0.0
    %v833 = vand.u32 %v46, 4294901760
    %834 = vmatpush1.msra.mxu0 %v833
    %835 = vmatprep.subr.mxu0 0.0
    %v836 = vand.u32 %v45, 4294901760
    %837 = vmatpush1.msra.mxu0 %v836
    %838 = vmatprep.subr.mxu0 0.0
    %v839 = vand.u32 %v44, 4294901760
    %840 = vmatpush1.msra.mxu0 %v839
    %841 = vmatprep.subr.mxu0 0.0
    %v842 = vand.u32 %v43, 4294901760
    %843 = vmatpush1.msra.mxu0 %v842
    %844 = vmatprep.subr.mxu0 0.0
    %v845 = vand.u32 %v42, 4294901760
    %846 = vmatpush1.msra.mxu0 %v845
    %847 = vmatprep.subr.mxu0 0.0
    %v848 = vand.u32 %v41, 4294901760
    %849 = vmatpush1.msra.mxu0 %v848
    %850 = vmatprep.subr.mxu0 0.0
    %v851 = vand.u32 %v40, 4294901760
    %852 = vmatpush1.msra.mxu0 %v851
    %853 = vmatprep.subr.mxu0 0.0
    %v854 = vand.u32 %v39, 4294901760
    %855 = vmatpush1.msra.mxu0 %v854
    %856 = vmatprep.subr.mxu0 0.0
    %v857 = vand.u32 %v38, 4294901760
    %858 = vmatpush1.msra.mxu0 %v857
    %859 = vmatprep.subr.mxu0 0.0
    %v860 = vand.u32 %v37, 4294901760
    %861 = vmatpush1.msra.mxu0 %v860
    %862 = vmatprep.subr.mxu0 0.0
    %v863 = vand.u32 %v36, 4294901760
    %864 = vmatpush1.msra.mxu0 %v863
    %865 = vmatprep.subr.mxu0 0.0
    %v866 = vand.u32 %v35, 4294901760
    %867 = vmatpush1.msra.mxu0 %v866
    %868 = vmatprep.subr.mxu0 0.0
    %v869 = vand.u32 %v34, 4294901760
    %870 = vmatpush1.msra.mxu0 %v869
    %871 = vmatprep.subr.mxu0 0.0
    %v872 = vand.u32 %v33, 4294901760
    %873 = vmatpush1.msra.mxu0 %v872
    %874 = vmatprep.subr.mxu0 0.0
    %v875 = vand.u32 %v32, 4294901760
    %876 = vmatpush1.msra.mxu0 %v875
    %877 = vmatprep.subr.mxu0 0.0
    %v878 = vand.u32 %v63, 4294901760
    %879 = vmatpush2.msra.mxu0 %v878
    %880 = vmatprep.subr.mxu0 0.0
    %v881 = vand.u32 %v62, 4294901760
    %882 = vmatpush2.msra.mxu0 %v881
    %883 = vmatprep.subr.mxu0 0.0
    %v884 = vand.u32 %v61, 4294901760
    %885 = vmatpush2.msra.mxu0 %v884
    %886 = vmatprep.subr.mxu0 0.0
    %v887 = vand.u32 %v60, 4294901760
    %888 = vmatpush2.msra.mxu0 %v887
    %889 = vmatprep.subr.mxu0 0.0
    %v890 = vand.u32 %v59, 4294901760
    %891 = vmatpush2.msra.mxu0 %v890
    %892 = vmatprep.subr.mxu0 0.0
    %v893 = vand.u32 %v58, 4294901760
    %894 = vmatpush2.msra.mxu0 %v893
    %895 = vmatprep.subr.mxu0 0.0
    %v896 = vand.u32 %v57, 4294901760
    %897 = vmatpush2.msra.mxu0 %v896
    %898 = vmatprep.subr.mxu0 0.0
    %v899 = vand.u32 %v56, 4294901760
    %900 = vmatpush2.msra.mxu0 %v899
    %901 = vmatprep.subr.mxu0 0.0
    %v902 = vand.u32 %v55, 4294901760
    %903 = vmatpush2.msra.mxu0 %v902
    %904 = vmatprep.subr.mxu0 0.0
    %v905 = vand.u32 %v54, 4294901760
    %906 = vmatpush2.msra.mxu0 %v905
    %907 = vmatprep.subr.mxu0 0.0
    %v908 = vand.u32 %v53, 4294901760
    %909 = vmatpush2.msra.mxu0 %v908
    %910 = vmatprep.subr.mxu0 0.0
    %v911 = vand.u32 %v52, 4294901760
    %912 = vmatpush2.msra.mxu0 %v911
    %913 = vmatprep.subr.mxu0 0.0
    %v914 = vand.u32 %v51, 4294901760
    %915 = vmatpush2.msra.mxu0 %v914
    %916 = vmatprep.subr.mxu0 0.0
    %v917 = vand.u32 %v50, 4294901760
    %918 = vmatpush2.msra.mxu0 %v917
    %919 = vmatprep.subr.mxu0 0.0
    %v920 = vand.u32 %v49, 4294901760
    %921 = vmatpush2.msra.mxu0 %v920
    %922 = vmatprep.subr.mxu0 0.0
    %v923 = vand.u32 %v48, 4294901760
    %924 = vmatpush2.msra.mxu0 %v923
    %v925 = vand.u32 %v31, 4294901760
    %926 = vmatprep.mubr.f32.mxu0 %v925
    %v927 = vand.u32 %v30, 4294901760
    %928 = vmatmul.mubr.f32.gmra.mxu0 %v927
    %v929 = vpop.f32.mrf.mxu0
    %v930 = vadd.f32 %v826, %v929
    %v931 = vpop.f32.mrf.mxu0
    %932 = vdwg.mxu0
    %v933 = vmax.f32 %v930, 0.0
    %v934 = vld [vmem:[%s3] sm:$0xff]
    %v935 = vld [vmem:[%s3 + $0x8] sm:$0xff]
    %v936 = vld [vmem:[%s3 + $0x10] sm:$0xff]
    %v937 = vld [vmem:[%s3 + $0x18] sm:$0xff]
    %v938 = vld [vmem:[%s3 + $0x20] sm:$0xff]
    %v939 = vld [vmem:[%s3 + $0x28] sm:$0xff]
    %v940 = vld [vmem:[%s3 + $0x30] sm:$0xff]
    %v941 = vld [vmem:[%s3 + $0x38] sm:$0xff]
    %v942 = vld [vmem:[%s4] sm:$0x1]
    %v944 = vlaneseq
    %v945 = vshrl.u32 %v944, 7
    %v946 = vsub.s32 0, %v945
    %v947 = vrot.slane %v942, %v946
    %vm949 = vcmask 523264
    %v951 = vsel %vm949, %v933, 0
    %953 = vmatprep.subr.mxu0 0.0
    %954 = vmatpush1.msra.mxu0 0.0
    %955 = vmatprep.subr.mxu0 0.0
    %956 = vmatpush1.msra.mxu0 0.0
    %957 = vmatprep.subr.mxu0 0.0
    %958 = vmatpush1.msra.mxu0 0.0
    %959 = vmatprep.subr.mxu0 0.0
    %960 = vmatpush1.msra.mxu0 0.0
    %961 = vmatprep.subr.mxu0 0.0
    %962 = vmatpush1.msra.mxu0 0.0
    %963 = vmatprep.subr.mxu0 0.0
    %964 = vmatpush1.msra.mxu0 0.0
    %965 = vmatprep.subr.mxu0 0.0
    %966 = vmatpush1.msra.mxu0 0.0
    %967 = vmatprep.subr.mxu0 0.0
    %968 = vmatpush1.msra.mxu0 0.0
    %969 = vmatprep.subr.mxu0 0.0
    %v970 = vand.u32 %v941, 4294901760
    %971 = vmatpush1.msra.mxu0 %v970
    %972 = vmatprep.subr.mxu0 0.0
    %v973 = vand.u32 %v940, 4294901760
    %974 = vmatpush1.msra.mxu0 %v973
    %975 = vmatprep.subr.mxu0 0.0
    %v976 = vand.u32 %v939, 4294901760
    %977 = vmatpush1.msra.mxu0 %v976
    %978 = vmatprep.subr.mxu0 0.0
    %v979 = vand.u32 %v938, 4294901760
    %980 = vmatpush1.msra.mxu0 %v979
    %981 = vmatprep.subr.mxu0 0.0
    %v982 = vand.u32 %v937, 4294901760
    %983 = vmatpush1.msra.mxu0 %v982
    %984 = vmatprep.subr.mxu0 0.0
    %v985 = vand.u32 %v936, 4294901760
    %986 = vmatpush1.msra.mxu0 %v985
    %987 = vmatprep.subr.mxu0 0.0
    %v988 = vand.u32 %v935, 4294901760
    %989 = vmatpush1.msra.mxu0 %v988
    %990 = vmatprep.subr.mxu0 0.0
    %v991 = vand.u32 %v934, 4294901760
    %992 = vmatpush1.msra.mxu0 %v991
    %993 = vmatprep.subr.mxu0 0.0
    %994 = vmatpush2.msra.mxu0 0.0
    %995 = vmatprep.subr.mxu0 0.0
    %996 = vmatpush2.msra.mxu0 0.0
    %997 = vmatprep.subr.mxu0 0.0
    %998 = vmatpush2.msra.mxu0 0.0
    %999 = vmatprep.subr.mxu0 0.0
    %1000 = vmatpush2.msra.mxu0 0.0
    %1001 = vmatprep.subr.mxu0 0.0
    %1002 = vmatpush2.msra.mxu0 0.0
    %1003 = vmatprep.subr.mxu0 0.0
    %1004 = vmatpush2.msra.mxu0 0.0
    %1005 = vmatprep.subr.mxu0 0.0
    %1006 = vmatpush2.msra.mxu0 0.0
    %1007 = vmatprep.subr.mxu0 0.0
    %1008 = vmatpush2.msra.mxu0 0.0
    %1009 = vmatprep.subr.mxu0 0.0
    %1010 = vmatpush2.msra.mxu0 0.0
    %1011 = vmatprep.subr.mxu0 0.0
    %1012 = vmatpush2.msra.mxu0 0.0
    %1013 = vmatprep.subr.mxu0 0.0
    %1014 = vmatpush2.msra.mxu0 0.0
    %1015 = vmatprep.subr.mxu0 0.0
    %1016 = vmatpush2.msra.mxu0 0.0
    %1017 = vmatprep.subr.mxu0 0.0
    %1018 = vmatpush2.msra.mxu0 0.0
    %1019 = vmatprep.subr.mxu0 0.0
    %1020 = vmatpush2.msra.mxu0 0.0
    %1021 = vmatprep.subr.mxu0 0.0
    %1022 = vmatpush2.msra.mxu0 0.0
    %1023 = vmatprep.subr.mxu0 0.0
    %1024 = vmatpush2.msra.mxu0 0.0
    %1025 = vmatprep.mubr.f32.mxu0 0.0
    %v1026 = vand.u32 %v951, 4294901760
    %v1027 = vsub.f32 %v951, %v1026
    %v1028 = vand.u32 %v1027, 4294901760
    %v1029 = vsub.f32 %v1027, %v1028
    %v1030 = vand.u32 %v1029, 4294901760
    %1031 = vmatmul.mubr.f32.gmra.mxu0 %v1030
    %v1032 = vpop.f32.mrf.mxu0
    %v1033 = vadd.f32 %v947, %v1032
    %v1034 = vpop.f32.mrf.mxu0
    %1035 = vdwg.mxu0
    %1036 = vmatprep.subr.mxu0 0.0
    %1037 = vmatpush1.msra.mxu0 0.0
    %1038 = vmatprep.subr.mxu0 0.0
    %1039 = vmatpush1.msra.mxu0 0.0
    %1040 = vmatprep.subr.mxu0 0.0
    %1041 = vmatpush1.msra.mxu0 0.0
    %1042 = vmatprep.subr.mxu0 0.0
    %1043 = vmatpush1.msra.mxu0 0.0
    %1044 = vmatprep.subr.mxu0 0.0
    %1045 = vmatpush1.msra.mxu0 0.0
    %1046 = vmatprep.subr.mxu0 0.0
    %1047 = vmatpush1.msra.mxu0 0.0
    %1048 = vmatprep.subr.mxu0 0.0
    %1049 = vmatpush1.msra.mxu0 0.0
    %1050 = vmatprep.subr.mxu0 0.0
    %1051 = vmatpush1.msra.mxu0 0.0
    %1052 = vmatprep.subr.mxu0 0.0
    %v1053 = vand.u32 %v941, 4294901760
    %v1054 = vsub.f32 %v941, %v1053
    %v1055 = vand.u32 %v1054, 4294901760
    %v1056 = vsub.f32 %v1054, %v1055
    %v1057 = vand.u32 %v1056, 4294901760
    %1058 = vmatpush1.msra.mxu0 %v1057
    %1059 = vmatprep.subr.mxu0 0.0
    %v1060 = vand.u32 %v940, 4294901760
    %v1061 = vsub.f32 %v940, %v1060
    %v1062 = vand.u32 %v1061, 4294901760
    %v1063 = vsub.f32 %v1061, %v1062
    %v1064 = vand.u32 %v1063, 4294901760
    %1065 = vmatpush1.msra.mxu0 %v1064
    %1066 = vmatprep.subr.mxu0 0.0
    %v1067 = vand.u32 %v939, 4294901760
    %v1068 = vsub.f32 %v939, %v1067
    %v1069 = vand.u32 %v1068, 4294901760
    %v1070 = vsub.f32 %v1068, %v1069
    %v1071 = vand.u32 %v1070, 4294901760
    %1072 = vmatpush1.msra.mxu0 %v1071
    %1073 = vmatprep.subr.mxu0 0.0
    %v1074 = vand.u32 %v938, 4294901760
    %v1075 = vsub.f32 %v938, %v1074
    %v1076 = vand.u32 %v1075, 4294901760
    %v1077 = vsub.f32 %v1075, %v1076
    %v1078 = vand.u32 %v1077, 4294901760
    %1079 = vmatpush1.msra.mxu0 %v1078
    %1080 = vmatprep.subr.mxu0 0.0
    %v1081 = vand.u32 %v937, 4294901760
    %v1082 = vsub.f32 %v937, %v1081
    %v1083 = vand.u32 %v1082, 4294901760
    %v1084 = vsub.f32 %v1082, %v1083
    %v1085 = vand.u32 %v1084, 4294901760
    %1086 = vmatpush1.msra.mxu0 %v1085
    %1087 = vmatprep.subr.mxu0 0.0
    %v1088 = vand.u32 %v936, 4294901760
    %v1089 = vsub.f32 %v936, %v1088
    %v1090 = vand.u32 %v1089, 4294901760
    %v1091 = vsub.f32 %v1089, %v1090
    %v1092 = vand.u32 %v1091, 4294901760
    %1093 = vmatpush1.msra.mxu0 %v1092
    %1094 = vmatprep.subr.mxu0 0.0
    %v1095 = vand.u32 %v935, 4294901760
    %v1096 = vsub.f32 %v935, %v1095
    %v1097 = vand.u32 %v1096, 4294901760
    %v1098 = vsub.f32 %v1096, %v1097
    %v1099 = vand.u32 %v1098, 4294901760
    %1100 = vmatpush1.msra.mxu0 %v1099
    %1101 = vmatprep.subr.mxu0 0.0
    %v1102 = vand.u32 %v934, 4294901760
    %v1103 = vsub.f32 %v934, %v1102
    %v1104 = vand.u32 %v1103, 4294901760
    %v1105 = vsub.f32 %v1103, %v1104
    %v1106 = vand.u32 %v1105, 4294901760
    %1107 = vmatpush1.msra.mxu0 %v1106
    %1108 = vmatprep.subr.mxu0 0.0
    %1109 = vmatpush2.msra.mxu0 0.0
    %1110 = vmatprep.subr.mxu0 0.0
    %1111 = vmatpush2.msra.mxu0 0.0
    %1112 = vmatprep.subr.mxu0 0.0
    %1113 = vmatpush2.msra.mxu0 0.0
    %1114 = vmatprep.subr.mxu0 0.0
    %1115 = vmatpush2.msra.mxu0 0.0
    %1116 = vmatprep.subr.mxu0 0.0
    %1117 = vmatpush2.msra.mxu0 0.0
    %1118 = vmatprep.subr.mxu0 0.0
    %1119 = vmatpush2.msra.mxu0 0.0
    %1120 = vmatprep.subr.mxu0 0.0
    %1121 = vmatpush2.msra.mxu0 0.0
    %1122 = vmatprep.subr.mxu0 0.0
    %1123 = vmatpush2.msra.mxu0 0.0
    %1124 = vmatprep.subr.mxu0 0.0
    %1125 = vmatpush2.msra.mxu0 0.0
    %1126 = vmatprep.subr.mxu0 0.0
    %1127 = vmatpush2.msra.mxu0 0.0
    %1128 = vmatprep.subr.mxu0 0.0
    %1129 = vmatpush2.msra.mxu0 0.0
    %1130 = vmatprep.subr.mxu0 0.0
    %1131 = vmatpush2.msra.mxu0 0.0
    %1132 = vmatprep.subr.mxu0 0.0
    %1133 = vmatpush2.msra.mxu0 0.0
    %1134 = vmatprep.subr.mxu0 0.0
    %1135 = vmatpush2.msra.mxu0 0.0
    %1136 = vmatprep.subr.mxu0 0.0
    %1137 = vmatpush2.msra.mxu0 0.0
    %1138 = vmatprep.subr.mxu0 0.0
    %1139 = vmatpush2.msra.mxu0 0.0
    %1140 = vmatprep.mubr.f32.mxu0 0.0
    %v1141 = vand.u32 %v951, 4294901760
    %1142 = vmatmul.mubr.f32.gmra.mxu0 %v1141
    %v1143 = vpop.f32.mrf.mxu0
    %v1144 = vadd.f32 %v1033, %v1143
    %v1145 = vpop.f32.mrf.mxu0
    %1146 = vdwg.mxu0
    %1147 = vmatprep.subr.mxu0 0.0
    %1148 = vmatpush1.msra.mxu0 0.0
    %1149 = vmatprep.subr.mxu0 0.0
    %1150 = vmatpush1.msra.mxu0 0.0
    %1151 = vmatprep.subr.mxu0 0.0
    %1152 = vmatpush1.msra.mxu0 0.0
    %1153 = vmatprep.subr.mxu0 0.0
    %1154 = vmatpush1.msra.mxu0 0.0
    %1155 = vmatprep.subr.mxu0 0.0
    %1156 = vmatpush1.msra.mxu0 0.0
    %1157 = vmatprep.subr.mxu0 0.0
    %1158 = vmatpush1.msra.mxu0 0.0
    %1159 = vmatprep.subr.mxu0 0.0
    %1160 = vmatpush1.msra.mxu0 0.0
    %1161 = vmatprep.subr.mxu0 0.0
    %1162 = vmatpush1.msra.mxu0 0.0
    %1163 = vmatprep.subr.mxu0 0.0
    %v1164 = vand.u32 %v941, 4294901760
    %v1165 = vsub.f32 %v941, %v1164
    %1166 = vmatpush1.msra.mxu0 %v1165
    %1167 = vmatprep.subr.mxu0 0.0
    %v1168 = vand.u32 %v940, 4294901760
    %v1169 = vsub.f32 %v940, %v1168
    %1170 = vmatpush1.msra.mxu0 %v1169
    %1171 = vmatprep.subr.mxu0 0.0
    %v1172 = vand.u32 %v939, 4294901760
    %v1173 = vsub.f32 %v939, %v1172
    %1174 = vmatpush1.msra.mxu0 %v1173
    %1175 = vmatprep.subr.mxu0 0.0
    %v1176 = vand.u32 %v938, 4294901760
    %v1177 = vsub.f32 %v938, %v1176
    %1178 = vmatpush1.msra.mxu0 %v1177
    %1179 = vmatprep.subr.mxu0 0.0
    %v1180 = vand.u32 %v937, 4294901760
    %v1181 = vsub.f32 %v937, %v1180
    %1182 = vmatpush1.msra.mxu0 %v1181
    %1183 = vmatprep.subr.mxu0 0.0
    %v1184 = vand.u32 %v936, 4294901760
    %v1185 = vsub.f32 %v936, %v1184
    %1186 = vmatpush1.msra.mxu0 %v1185
    %1187 = vmatprep.subr.mxu0 0.0
    %v1188 = vand.u32 %v935, 4294901760
    %v1189 = vsub.f32 %v935, %v1188
    %1190 = vmatpush1.msra.mxu0 %v1189
    %1191 = vmatprep.subr.mxu0 0.0
    %v1192 = vand.u32 %v934, 4294901760
    %v1193 = vsub.f32 %v934, %v1192
    %1194 = vmatpush1.msra.mxu0 %v1193
    %1195 = vmatprep.subr.mxu0 0.0
    %1196 = vmatpush2.msra.mxu0 0.0
    %1197 = vmatprep.subr.mxu0 0.0
    %1198 = vmatpush2.msra.mxu0 0.0
    %1199 = vmatprep.subr.mxu0 0.0
    %1200 = vmatpush2.msra.mxu0 0.0
    %1201 = vmatprep.subr.mxu0 0.0
    %1202 = vmatpush2.msra.mxu0 0.0
    %1203 = vmatprep.subr.mxu0 0.0
    %1204 = vmatpush2.msra.mxu0 0.0
    %1205 = vmatprep.subr.mxu0 0.0
    %1206 = vmatpush2.msra.mxu0 0.0
    %1207 = vmatprep.subr.mxu0 0.0
    %1208 = vmatpush2.msra.mxu0 0.0
    %1209 = vmatprep.subr.mxu0 0.0
    %1210 = vmatpush2.msra.mxu0 0.0
    %1211 = vmatprep.subr.mxu0 0.0
    %1212 = vmatpush2.msra.mxu0 0.0
    %1213 = vmatprep.subr.mxu0 0.0
    %1214 = vmatpush2.msra.mxu0 0.0
    %1215 = vmatprep.subr.mxu0 0.0
    %1216 = vmatpush2.msra.mxu0 0.0
    %1217 = vmatprep.subr.mxu0 0.0
    %1218 = vmatpush2.msra.mxu0 0.0
    %1219 = vmatprep.subr.mxu0 0.0
    %1220 = vmatpush2.msra.mxu0 0.0
    %1221 = vmatprep.subr.mxu0 0.0
    %1222 = vmatpush2.msra.mxu0 0.0
    %1223 = vmatprep.subr.mxu0 0.0
    %1224 = vmatpush2.msra.mxu0 0.0
    %1225 = vmatprep.subr.mxu0 0.0
    %1226 = vmatpush2.msra.mxu0 0.0
    %1227 = vmatprep.mubr.f32.mxu0 0.0
    %v1228 = vand.u32 %v951, 4294901760
    %v1229 = vsub.f32 %v951, %v1228
    %1230 = vmatmul.mubr.f32.gmra.mxu0 %v1229
    %v1231 = vpop.f32.mrf.mxu0
    %v1232 = vadd.f32 %v1144, %v1231
    %v1233 = vpop.f32.mrf.mxu0
    %1234 = vdwg.mxu0
    %1235 = vmatprep.subr.mxu0 0.0
    %1236 = vmatpush1.msra.mxu0 0.0
    %1237 = vmatprep.subr.mxu0 0.0
    %1238 = vmatpush1.msra.mxu0 0.0
    %1239 = vmatprep.subr.mxu0 0.0
    %1240 = vmatpush1.msra.mxu0 0.0
    %1241 = vmatprep.subr.mxu0 0.0
    %1242 = vmatpush1.msra.mxu0 0.0
    %1243 = vmatprep.subr.mxu0 0.0
    %1244 = vmatpush1.msra.mxu0 0.0
    %1245 = vmatprep.subr.mxu0 0.0
    %1246 = vmatpush1.msra.mxu0 0.0
    %1247 = vmatprep.subr.mxu0 0.0
    %1248 = vmatpush1.msra.mxu0 0.0
    %1249 = vmatprep.subr.mxu0 0.0
    %1250 = vmatpush1.msra.mxu0 0.0
    %1251 = vmatprep.subr.mxu0 0.0
    %v1252 = vand.u32 %v941, 4294901760
    %1253 = vmatpush1.msra.mxu0 %v1252
    %1254 = vmatprep.subr.mxu0 0.0
    %v1255 = vand.u32 %v940, 4294901760
    %1256 = vmatpush1.msra.mxu0 %v1255
    %1257 = vmatprep.subr.mxu0 0.0
    %v1258 = vand.u32 %v939, 4294901760
    %1259 = vmatpush1.msra.mxu0 %v1258
    %1260 = vmatprep.subr.mxu0 0.0
    %v1261 = vand.u32 %v938, 4294901760
    %1262 = vmatpush1.msra.mxu0 %v1261
    %1263 = vmatprep.subr.mxu0 0.0
    %v1264 = vand.u32 %v937, 4294901760
    %1265 = vmatpush1.msra.mxu0 %v1264
    %1266 = vmatprep.subr.mxu0 0.0
    %v1267 = vand.u32 %v936, 4294901760
    %1268 = vmatpush1.msra.mxu0 %v1267
    %1269 = vmatprep.subr.mxu0 0.0
    %v1270 = vand.u32 %v935, 4294901760
    %1271 = vmatpush1.msra.mxu0 %v1270
    %1272 = vmatprep.subr.mxu0 0.0
    %v1273 = vand.u32 %v934, 4294901760
    %1274 = vmatpush1.msra.mxu0 %v1273
    %1275 = vmatprep.subr.mxu0 0.0
    %1276 = vmatpush2.msra.mxu0 0.0
    %1277 = vmatprep.subr.mxu0 0.0
    %1278 = vmatpush2.msra.mxu0 0.0
    %1279 = vmatprep.subr.mxu0 0.0
    %1280 = vmatpush2.msra.mxu0 0.0
    %1281 = vmatprep.subr.mxu0 0.0
    %1282 = vmatpush2.msra.mxu0 0.0
    %1283 = vmatprep.subr.mxu0 0.0
    %1284 = vmatpush2.msra.mxu0 0.0
    %1285 = vmatprep.subr.mxu0 0.0
    %1286 = vmatpush2.msra.mxu0 0.0
    %1287 = vmatprep.subr.mxu0 0.0
    %1288 = vmatpush2.msra.mxu0 0.0
    %1289 = vmatprep.subr.mxu0 0.0
    %1290 = vmatpush2.msra.mxu0 0.0
    %1291 = vmatprep.subr.mxu0 0.0
    %1292 = vmatpush2.msra.mxu0 0.0
    %1293 = vmatprep.subr.mxu0 0.0
    %1294 = vmatpush2.msra.mxu0 0.0
    %1295 = vmatprep.subr.mxu0 0.0
    %1296 = vmatpush2.msra.mxu0 0.0
    %1297 = vmatprep.subr.mxu0 0.0
    %1298 = vmatpush2.msra.mxu0 0.0
    %1299 = vmatprep.subr.mxu0 0.0
    %1300 = vmatpush2.msra.mxu0 0.0
    %1301 = vmatprep.subr.mxu0 0.0
    %1302 = vmatpush2.msra.mxu0 0.0
    %1303 = vmatprep.subr.mxu0 0.0
    %1304 = vmatpush2.msra.mxu0 0.0
    %1305 = vmatprep.subr.mxu0 0.0
    %1306 = vmatpush2.msra.mxu0 0.0
    %1307 = vmatprep.mubr.f32.mxu0 0.0
    %v1308 = vand.u32 %v951, 4294901760
    %v1309 = vsub.f32 %v951, %v1308
    %v1310 = vand.u32 %v1309, 4294901760
    %1311 = vmatmul.mubr.f32.gmra.mxu0 %v1310
    %v1312 = vpop.f32.mrf.mxu0
    %v1313 = vadd.f32 %v1232, %v1312
    %v1314 = vpop.f32.mrf.mxu0
    %1315 = vdwg.mxu0
    %1316 = vmatprep.subr.mxu0 0.0
    %1317 = vmatpush1.msra.mxu0 0.0
    %1318 = vmatprep.subr.mxu0 0.0
    %1319 = vmatpush1.msra.mxu0 0.0
    %1320 = vmatprep.subr.mxu0 0.0
    %1321 = vmatpush1.msra.mxu0 0.0
    %1322 = vmatprep.subr.mxu0 0.0
    %1323 = vmatpush1.msra.mxu0 0.0
    %1324 = vmatprep.subr.mxu0 0.0
    %1325 = vmatpush1.msra.mxu0 0.0
    %1326 = vmatprep.subr.mxu0 0.0
    %1327 = vmatpush1.msra.mxu0 0.0
    %1328 = vmatprep.subr.mxu0 0.0
    %1329 = vmatpush1.msra.mxu0 0.0
    %1330 = vmatprep.subr.mxu0 0.0
    %1331 = vmatpush1.msra.mxu0 0.0
    %1332 = vmatprep.subr.mxu0 0.0
    %v1333 = vand.u32 %v941, 4294901760
    %v1334 = vsub.f32 %v941, %v1333
    %v1335 = vand.u32 %v1334, 4294901760
    %1336 = vmatpush1.msra.mxu0 %v1335
    %1337 = vmatprep.subr.mxu0 0.0
    %v1338 = vand.u32 %v940, 4294901760
    %v1339 = vsub.f32 %v940, %v1338
    %v1340 = vand.u32 %v1339, 4294901760
    %1341 = vmatpush1.msra.mxu0 %v1340
    %1342 = vmatprep.subr.mxu0 0.0
    %v1343 = vand.u32 %v939, 4294901760
    %v1344 = vsub.f32 %v939, %v1343
    %v1345 = vand.u32 %v1344, 4294901760
    %1346 = vmatpush1.msra.mxu0 %v1345
    %1347 = vmatprep.subr.mxu0 0.0
    %v1348 = vand.u32 %v938, 4294901760
    %v1349 = vsub.f32 %v938, %v1348
    %v1350 = vand.u32 %v1349, 4294901760
    %1351 = vmatpush1.msra.mxu0 %v1350
    %1352 = vmatprep.subr.mxu0 0.0
    %v1353 = vand.u32 %v937, 4294901760
    %v1354 = vsub.f32 %v937, %v1353
    %v1355 = vand.u32 %v1354, 4294901760
    %1356 = vmatpush1.msra.mxu0 %v1355
    %1357 = vmatprep.subr.mxu0 0.0
    %v1358 = vand.u32 %v936, 4294901760
    %v1359 = vsub.f32 %v936, %v1358
    %v1360 = vand.u32 %v1359, 4294901760
    %1361 = vmatpush1.msra.mxu0 %v1360
    %1362 = vmatprep.subr.mxu0 0.0
    %v1363 = vand.u32 %v935, 4294901760
    %v1364 = vsub.f32 %v935, %v1363
    %v1365 = vand.u32 %v1364, 4294901760
    %1366 = vmatpush1.msra.mxu0 %v1365
    %1367 = vmatprep.subr.mxu0 0.0
    %v1368 = vand.u32 %v934, 4294901760
    %v1369 = vsub.f32 %v934, %v1368
    %v1370 = vand.u32 %v1369, 4294901760
    %1371 = vmatpush1.msra.mxu0 %v1370
    %1372 = vmatprep.subr.mxu0 0.0
    %1373 = vmatpush2.msra.mxu0 0.0
    %1374 = vmatprep.subr.mxu0 0.0
    %1375 = vmatpush2.msra.mxu0 0.0
    %1376 = vmatprep.subr.mxu0 0.0
    %1377 = vmatpush2.msra.mxu0 0.0
    %1378 = vmatprep.subr.mxu0 0.0
    %1379 = vmatpush2.msra.mxu0 0.0
    %1380 = vmatprep.subr.mxu0 0.0
    %1381 = vmatpush2.msra.mxu0 0.0
    %1382 = vmatprep.subr.mxu0 0.0
    %1383 = vmatpush2.msra.mxu0 0.0
    %1384 = vmatprep.subr.mxu0 0.0
    %1385 = vmatpush2.msra.mxu0 0.0
    %1386 = vmatprep.subr.mxu0 0.0
    %1387 = vmatpush2.msra.mxu0 0.0
    %1388 = vmatprep.subr.mxu0 0.0
    %1389 = vmatpush2.msra.mxu0 0.0
    %1390 = vmatprep.subr.mxu0 0.0
    %1391 = vmatpush2.msra.mxu0 0.0
    %1392 = vmatprep.subr.mxu0 0.0
    %1393 = vmatpush2.msra.mxu0 0.0
    %1394 = vmatprep.subr.mxu0 0.0
    %1395 = vmatpush2.msra.mxu0 0.0
    %1396 = vmatprep.subr.mxu0 0.0
    %1397 = vmatpush2.msra.mxu0 0.0
    %1398 = vmatprep.subr.mxu0 0.0
    %1399 = vmatpush2.msra.mxu0 0.0
    %1400 = vmatprep.subr.mxu0 0.0
    %1401 = vmatpush2.msra.mxu0 0.0
    %1402 = vmatprep.subr.mxu0 0.0
    %1403 = vmatpush2.msra.mxu0 0.0
    %1404 = vmatprep.mubr.f32.mxu0 0.0
    %v1405 = vand.u32 %v951, 4294901760
    %1406 = vmatmul.mubr.f32.gmra.mxu0 %v1405
    %v1407 = vpop.f32.mrf.mxu0
    %v1408 = vadd.f32 %v1313, %v1407
    %v1409 = vpop.f32.mrf.mxu0
    %1410 = vdwg.mxu0
    %1411 = vmatprep.subr.mxu0 0.0
    %1412 = vmatpush1.msra.mxu0 0.0
    %1413 = vmatprep.subr.mxu0 0.0
    %1414 = vmatpush1.msra.mxu0 0.0
    %1415 = vmatprep.subr.mxu0 0.0
    %1416 = vmatpush1.msra.mxu0 0.0
    %1417 = vmatprep.subr.mxu0 0.0
    %1418 = vmatpush1.msra.mxu0 0.0
    %1419 = vmatprep.subr.mxu0 0.0
    %1420 = vmatpush1.msra.mxu0 0.0
    %1421 = vmatprep.subr.mxu0 0.0
    %1422 = vmatpush1.msra.mxu0 0.0
    %1423 = vmatprep.subr.mxu0 0.0
    %1424 = vmatpush1.msra.mxu0 0.0
    %1425 = vmatprep.subr.mxu0 0.0
    %1426 = vmatpush1.msra.mxu0 0.0
    %1427 = vmatprep.subr.mxu0 0.0
    %v1428 = vand.u32 %v941, 4294901760
    %1429 = vmatpush1.msra.mxu0 %v1428
    %1430 = vmatprep.subr.mxu0 0.0
    %v1431 = vand.u32 %v940, 4294901760
    %1432 = vmatpush1.msra.mxu0 %v1431
    %1433 = vmatprep.subr.mxu0 0.0
    %v1434 = vand.u32 %v939, 4294901760
    %1435 = vmatpush1.msra.mxu0 %v1434
    %1436 = vmatprep.subr.mxu0 0.0
    %v1437 = vand.u32 %v938, 4294901760
    %1438 = vmatpush1.msra.mxu0 %v1437
    %1439 = vmatprep.subr.mxu0 0.0
    %v1440 = vand.u32 %v937, 4294901760
    %1441 = vmatpush1.msra.mxu0 %v1440
    %1442 = vmatprep.subr.mxu0 0.0
    %v1443 = vand.u32 %v936, 4294901760
    %1444 = vmatpush1.msra.mxu0 %v1443
    %1445 = vmatprep.subr.mxu0 0.0
    %v1446 = vand.u32 %v935, 4294901760
    %1447 = vmatpush1.msra.mxu0 %v1446
    %1448 = vmatprep.subr.mxu0 0.0
    %v1449 = vand.u32 %v934, 4294901760
    %1450 = vmatpush1.msra.mxu0 %v1449
    %1451 = vmatprep.subr.mxu0 0.0
    %1452 = vmatpush2.msra.mxu0 0.0
    %1453 = vmatprep.subr.mxu0 0.0
    %1454 = vmatpush2.msra.mxu0 0.0
    %1455 = vmatprep.subr.mxu0 0.0
    %1456 = vmatpush2.msra.mxu0 0.0
    %1457 = vmatprep.subr.mxu0 0.0
    %1458 = vmatpush2.msra.mxu0 0.0
    %1459 = vmatprep.subr.mxu0 0.0
    %1460 = vmatpush2.msra.mxu0 0.0
    %1461 = vmatprep.subr.mxu0 0.0
    %1462 = vmatpush2.msra.mxu0 0.0
    %1463 = vmatprep.subr.mxu0 0.0
    %1464 = vmatpush2.msra.mxu0 0.0
    %1465 = vmatprep.subr.mxu0 0.0
    %1466 = vmatpush2.msra.mxu0 0.0
    %1467 = vmatprep.subr.mxu0 0.0
    %1468 = vmatpush2.msra.mxu0 0.0
    %1469 = vmatprep.subr.mxu0 0.0
    %1470 = vmatpush2.msra.mxu0 0.0
    %1471 = vmatprep.subr.mxu0 0.0
    %1472 = vmatpush2.msra.mxu0 0.0
    %1473 = vmatprep.subr.mxu0 0.0
    %1474 = vmatpush2.msra.mxu0 0.0
    %1475 = vmatprep.subr.mxu0 0.0
    %1476 = vmatpush2.msra.mxu0 0.0
    %1477 = vmatprep.subr.mxu0 0.0
    %1478 = vmatpush2.msra.mxu0 0.0
    %1479 = vmatprep.subr.mxu0 0.0
    %1480 = vmatpush2.msra.mxu0 0.0
    %1481 = vmatprep.subr.mxu0 0.0
    %1482 = vmatpush2.msra.mxu0 0.0
    %1483 = vmatprep.mubr.f32.mxu0 0.0
    %v1484 = vand.u32 %v951, 4294901760
    %1485 = vmatmul.mubr.f32.gmra.mxu0 %v1484
    %v1486 = vpop.f32.mrf.mxu0
    %v1487 = vadd.f32 %v1408, %v1486
    %v1488 = vpop.f32.mrf.mxu0
    %1489 = vdwg.mxu0
    %v1490 = vmax.f32 %v1487, 0.0
    %v1491 = vld [vmem:[%s5] sm:$0xff]
    %v1492 = vld [vmem:[%s5 + $0x8] sm:$0xff]
    %v1493 = vld [vmem:[%s6] sm:$0x1]
    %v1495 = vlaneseq
    %v1496 = vshrl.u32 %v1495, 7
    %v1497 = vsub.s32 0, %v1496
    %v1498 = vrot.slane %v1493, %v1497
    %vm1500 = vcmask 130048
    %v1502 = vsel %vm1500, %v1490, 0
    %1504 = vmatprep.subr.mxu0 0.0
    %1505 = vmatpush1.msra.mxu0 0.0
    %1506 = vmatprep.subr.mxu0 0.0
    %1507 = vmatpush1.msra.mxu0 0.0
    %1508 = vmatprep.subr.mxu0 0.0
    %1509 = vmatpush1.msra.mxu0 0.0
    %1510 = vmatprep.subr.mxu0 0.0
    %1511 = vmatpush1.msra.mxu0 0.0
    %1512 = vmatprep.subr.mxu0 0.0
    %1513 = vmatpush1.msra.mxu0 0.0
    %1514 = vmatprep.subr.mxu0 0.0
    %1515 = vmatpush1.msra.mxu0 0.0
    %1516 = vmatprep.subr.mxu0 0.0
    %1517 = vmatpush1.msra.mxu0 0.0
    %1518 = vmatprep.subr.mxu0 0.0
    %1519 = vmatpush1.msra.mxu0 0.0
    %1520 = vmatprep.subr.mxu0 0.0
    %1521 = vmatpush1.msra.mxu0 0.0
    %1522 = vmatprep.subr.mxu0 0.0
    %1523 = vmatpush1.msra.mxu0 0.0
    %1524 = vmatprep.subr.mxu0 0.0
    %1525 = vmatpush1.msra.mxu0 0.0
    %1526 = vmatprep.subr.mxu0 0.0
    %1527 = vmatpush1.msra.mxu0 0.0
    %1528 = vmatprep.subr.mxu0 0.0
    %1529 = vmatpush1.msra.mxu0 0.0
    %1530 = vmatprep.subr.mxu0 0.0
    %1531 = vmatpush1.msra.mxu0 0.0
    %1532 = vmatprep.subr.mxu0 0.0
    %v1533 = vand.u32 %v1492, 4294901760
    %1534 = vmatpush1.msra.mxu0 %v1533
    %1535 = vmatprep.subr.mxu0 0.0
    %v1536 = vand.u32 %v1491, 4294901760
    %1537 = vmatpush1.msra.mxu0 %v1536
    %1538 = vmatprep.subr.mxu0 0.0
    %1539 = vmatpush2.msra.mxu0 0.0
    %1540 = vmatprep.subr.mxu0 0.0
    %1541 = vmatpush2.msra.mxu0 0.0
    %1542 = vmatprep.subr.mxu0 0.0
    %1543 = vmatpush2.msra.mxu0 0.0
    %1544 = vmatprep.subr.mxu0 0.0
    %1545 = vmatpush2.msra.mxu0 0.0
    %1546 = vmatprep.subr.mxu0 0.0
    %1547 = vmatpush2.msra.mxu0 0.0
    %1548 = vmatprep.subr.mxu0 0.0
    %1549 = vmatpush2.msra.mxu0 0.0
    %1550 = vmatprep.subr.mxu0 0.0
    %1551 = vmatpush2.msra.mxu0 0.0
    %1552 = vmatprep.subr.mxu0 0.0
    %1553 = vmatpush2.msra.mxu0 0.0
    %1554 = vmatprep.subr.mxu0 0.0
    %1555 = vmatpush2.msra.mxu0 0.0
    %1556 = vmatprep.subr.mxu0 0.0
    %1557 = vmatpush2.msra.mxu0 0.0
    %1558 = vmatprep.subr.mxu0 0.0
    %1559 = vmatpush2.msra.mxu0 0.0
    %1560 = vmatprep.subr.mxu0 0.0
    %1561 = vmatpush2.msra.mxu0 0.0
    %1562 = vmatprep.subr.mxu0 0.0
    %1563 = vmatpush2.msra.mxu0 0.0
    %1564 = vmatprep.subr.mxu0 0.0
    %1565 = vmatpush2.msra.mxu0 0.0
    %1566 = vmatprep.subr.mxu0 0.0
    %1567 = vmatpush2.msra.mxu0 0.0
    %1568 = vmatprep.subr.mxu0 0.0
    %1569 = vmatpush2.msra.mxu0 0.0
    %1570 = vmatprep.mubr.f32.mxu0 0.0
    %v1571 = vand.u32 %v1502, 4294901760
    %v1572 = vsub.f32 %v1502, %v1571
    %v1573 = vand.u32 %v1572, 4294901760
    %v1574 = vsub.f32 %v1572, %v1573
    %v1575 = vand.u32 %v1574, 4294901760
    %1576 = vmatmul.mubr.f32.gmra.mxu0 %v1575
    %v1577 = vpop.f32.mrf.mxu0
    %v1578 = vadd.f32 %v1498, %v1577
    %v1579 = vpop.f32.mrf.mxu0
    %1580 = vdwg.mxu0
    %1581 = vmatprep.subr.mxu0 0.0
    %1582 = vmatpush1.msra.mxu0 0.0
    %1583 = vmatprep.subr.mxu0 0.0
    %1584 = vmatpush1.msra.mxu0 0.0
    %1585 = vmatprep.subr.mxu0 0.0
    %1586 = vmatpush1.msra.mxu0 0.0
    %1587 = vmatprep.subr.mxu0 0.0
    %1588 = vmatpush1.msra.mxu0 0.0
    %1589 = vmatprep.subr.mxu0 0.0
    %1590 = vmatpush1.msra.mxu0 0.0
    %1591 = vmatprep.subr.mxu0 0.0
    %1592 = vmatpush1.msra.mxu0 0.0
    %1593 = vmatprep.subr.mxu0 0.0
    %1594 = vmatpush1.msra.mxu0 0.0
    %1595 = vmatprep.subr.mxu0 0.0
    %1596 = vmatpush1.msra.mxu0 0.0
    %1597 = vmatprep.subr.mxu0 0.0
    %1598 = vmatpush1.msra.mxu0 0.0
    %1599 = vmatprep.subr.mxu0 0.0
    %1600 = vmatpush1.msra.mxu0 0.0
    %1601 = vmatprep.subr.mxu0 0.0
    %1602 = vmatpush1.msra.mxu0 0.0
    %1603 = vmatprep.subr.mxu0 0.0
    %1604 = vmatpush1.msra.mxu0 0.0
    %1605 = vmatprep.subr.mxu0 0.0
    %1606 = vmatpush1.msra.mxu0 0.0
    %1607 = vmatprep.subr.mxu0 0.0
    %1608 = vmatpush1.msra.mxu0 0.0
    %1609 = vmatprep.subr.mxu0 0.0
    %v1610 = vand.u32 %v1492, 4294901760
    %v1611 = vsub.f32 %v1492, %v1610
    %v1612 = vand.u32 %v1611, 4294901760
    %v1613 = vsub.f32 %v1611, %v1612
    %v1614 = vand.u32 %v1613, 4294901760
    %1615 = vmatpush1.msra.mxu0 %v1614
    %1616 = vmatprep.subr.mxu0 0.0
    %v1617 = vand.u32 %v1491, 4294901760
    %v1618 = vsub.f32 %v1491, %v1617
    %v1619 = vand.u32 %v1618, 4294901760
    %v1620 = vsub.f32 %v1618, %v1619
    %v1621 = vand.u32 %v1620, 4294901760
    %1622 = vmatpush1.msra.mxu0 %v1621
    %1623 = vmatprep.subr.mxu0 0.0
    %1624 = vmatpush2.msra.mxu0 0.0
    %1625 = vmatprep.subr.mxu0 0.0
    %1626 = vmatpush2.msra.mxu0 0.0
    %1627 = vmatprep.subr.mxu0 0.0
    %1628 = vmatpush2.msra.mxu0 0.0
    %1629 = vmatprep.subr.mxu0 0.0
    %1630 = vmatpush2.msra.mxu0 0.0
    %1631 = vmatprep.subr.mxu0 0.0
    %1632 = vmatpush2.msra.mxu0 0.0
    %1633 = vmatprep.subr.mxu0 0.0
    %1634 = vmatpush2.msra.mxu0 0.0
    %1635 = vmatprep.subr.mxu0 0.0
    %1636 = vmatpush2.msra.mxu0 0.0
    %1637 = vmatprep.subr.mxu0 0.0
    %1638 = vmatpush2.msra.mxu0 0.0
    %1639 = vmatprep.subr.mxu0 0.0
    %1640 = vmatpush2.msra.mxu0 0.0
    %1641 = vmatprep.subr.mxu0 0.0
    %1642 = vmatpush2.msra.mxu0 0.0
    %1643 = vmatprep.subr.mxu0 0.0
    %1644 = vmatpush2.msra.mxu0 0.0
    %1645 = vmatprep.subr.mxu0 0.0
    %1646 = vmatpush2.msra.mxu0 0.0
    %1647 = vmatprep.subr.mxu0 0.0
    %1648 = vmatpush2.msra.mxu0 0.0
    %1649 = vmatprep.subr.mxu0 0.0
    %1650 = vmatpush2.msra.mxu0 0.0
    %1651 = vmatprep.subr.mxu0 0.0
    %1652 = vmatpush2.msra.mxu0 0.0
    %1653 = vmatprep.subr.mxu0 0.0
    %1654 = vmatpush2.msra.mxu0 0.0
    %1655 = vmatprep.mubr.f32.mxu0 0.0
    %v1656 = vand.u32 %v1502, 4294901760
    %1657 = vmatmul.mubr.f32.gmra.mxu0 %v1656
    %v1658 = vpop.f32.mrf.mxu0
    %v1659 = vadd.f32 %v1578, %v1658
    %v1660 = vpop.f32.mrf.mxu0
    %1661 = vdwg.mxu0
    %1662 = vmatprep.subr.mxu0 0.0
    %1663 = vmatpush1.msra.mxu0 0.0
    %1664 = vmatprep.subr.mxu0 0.0
    %1665 = vmatpush1.msra.mxu0 0.0
    %1666 = vmatprep.subr.mxu0 0.0
    %1667 = vmatpush1.msra.mxu0 0.0
    %1668 = vmatprep.subr.mxu0 0.0
    %1669 = vmatpush1.msra.mxu0 0.0
    %1670 = vmatprep.subr.mxu0 0.0
    %1671 = vmatpush1.msra.mxu0 0.0
    %1672 = vmatprep.subr.mxu0 0.0
    %1673 = vmatpush1.msra.mxu0 0.0
    %1674 = vmatprep.subr.mxu0 0.0
    %1675 = vmatpush1.msra.mxu0 0.0
    %1676 = vmatprep.subr.mxu0 0.0
    %1677 = vmatpush1.msra.mxu0 0.0
    %1678 = vmatprep.subr.mxu0 0.0
    %1679 = vmatpush1.msra.mxu0 0.0
    %1680 = vmatprep.subr.mxu0 0.0
    %1681 = vmatpush1.msra.mxu0 0.0
    %1682 = vmatprep.subr.mxu0 0.0
    %1683 = vmatpush1.msra.mxu0 0.0
    %1684 = vmatprep.subr.mxu0 0.0
    %1685 = vmatpush1.msra.mxu0 0.0
    %1686 = vmatprep.subr.mxu0 0.0
    %1687 = vmatpush1.msra.mxu0 0.0
    %1688 = vmatprep.subr.mxu0 0.0
    %1689 = vmatpush1.msra.mxu0 0.0
    %1690 = vmatprep.subr.mxu0 0.0
    %v1691 = vand.u32 %v1492, 4294901760
    %v1692 = vsub.f32 %v1492, %v1691
    %1693 = vmatpush1.msra.mxu0 %v1692
    %1694 = vmatprep.subr.mxu0 0.0
    %v1695 = vand.u32 %v1491, 4294901760
    %v1696 = vsub.f32 %v1491, %v1695
    %1697 = vmatpush1.msra.mxu0 %v1696
    %1698 = vmatprep.subr.mxu0 0.0
    %1699 = vmatpush2.msra.mxu0 0.0
    %1700 = vmatprep.subr.mxu0 0.0
    %1701 = vmatpush2.msra.mxu0 0.0
    %1702 = vmatprep.subr.mxu0 0.0
    %1703 = vmatpush2.msra.mxu0 0.0
    %1704 = vmatprep.subr.mxu0 0.0
    %1705 = vmatpush2.msra.mxu0 0.0
    %1706 = vmatprep.subr.mxu0 0.0
    %1707 = vmatpush2.msra.mxu0 0.0
    %1708 = vmatprep.subr.mxu0 0.0
    %1709 = vmatpush2.msra.mxu0 0.0
    %1710 = vmatprep.subr.mxu0 0.0
    %1711 = vmatpush2.msra.mxu0 0.0
    %1712 = vmatprep.subr.mxu0 0.0
    %1713 = vmatpush2.msra.mxu0 0.0
    %1714 = vmatprep.subr.mxu0 0.0
    %1715 = vmatpush2.msra.mxu0 0.0
    %1716 = vmatprep.subr.mxu0 0.0
    %1717 = vmatpush2.msra.mxu0 0.0
    %1718 = vmatprep.subr.mxu0 0.0
    %1719 = vmatpush2.msra.mxu0 0.0
    %1720 = vmatprep.subr.mxu0 0.0
    %1721 = vmatpush2.msra.mxu0 0.0
    %1722 = vmatprep.subr.mxu0 0.0
    %1723 = vmatpush2.msra.mxu0 0.0
    %1724 = vmatprep.subr.mxu0 0.0
    %1725 = vmatpush2.msra.mxu0 0.0
    %1726 = vmatprep.subr.mxu0 0.0
    %1727 = vmatpush2.msra.mxu0 0.0
    %1728 = vmatprep.subr.mxu0 0.0
    %1729 = vmatpush2.msra.mxu0 0.0
    %1730 = vmatprep.mubr.f32.mxu0 0.0
    %v1731 = vand.u32 %v1502, 4294901760
    %v1732 = vsub.f32 %v1502, %v1731
    %1733 = vmatmul.mubr.f32.gmra.mxu0 %v1732
    %v1734 = vpop.f32.mrf.mxu0
    %v1735 = vadd.f32 %v1659, %v1734
    %v1736 = vpop.f32.mrf.mxu0
    %1737 = vdwg.mxu0
    %1738 = vmatprep.subr.mxu0 0.0
    %1739 = vmatpush1.msra.mxu0 0.0
    %1740 = vmatprep.subr.mxu0 0.0
    %1741 = vmatpush1.msra.mxu0 0.0
    %1742 = vmatprep.subr.mxu0 0.0
    %1743 = vmatpush1.msra.mxu0 0.0
    %1744 = vmatprep.subr.mxu0 0.0
    %1745 = vmatpush1.msra.mxu0 0.0
    %1746 = vmatprep.subr.mxu0 0.0
    %1747 = vmatpush1.msra.mxu0 0.0
    %1748 = vmatprep.subr.mxu0 0.0
    %1749 = vmatpush1.msra.mxu0 0.0
    %1750 = vmatprep.subr.mxu0 0.0
    %1751 = vmatpush1.msra.mxu0 0.0
    %1752 = vmatprep.subr.mxu0 0.0
    %1753 = vmatpush1.msra.mxu0 0.0
    %1754 = vmatprep.subr.mxu0 0.0
    %1755 = vmatpush1.msra.mxu0 0.0
    %1756 = vmatprep.subr.mxu0 0.0
    %1757 = vmatpush1.msra.mxu0 0.0
    %1758 = vmatprep.subr.mxu0 0.0
    %1759 = vmatpush1.msra.mxu0 0.0
    %1760 = vmatprep.subr.mxu0 0.0
    %1761 = vmatpush1.msra.mxu0 0.0
    %1762 = vmatprep.subr.mxu0 0.0
    %1763 = vmatpush1.msra.mxu0 0.0
    %1764 = vmatprep.subr.mxu0 0.0
    %1765 = vmatpush1.msra.mxu0 0.0
    %1766 = vmatprep.subr.mxu0 0.0
    %v1767 = vand.u32 %v1492, 4294901760
    %1768 = vmatpush1.msra.mxu0 %v1767
    %1769 = vmatprep.subr.mxu0 0.0
    %v1770 = vand.u32 %v1491, 4294901760
    %1771 = vmatpush1.msra.mxu0 %v1770
    %1772 = vmatprep.subr.mxu0 0.0
    %1773 = vmatpush2.msra.mxu0 0.0
    %1774 = vmatprep.subr.mxu0 0.0
    %1775 = vmatpush2.msra.mxu0 0.0
    %1776 = vmatprep.subr.mxu0 0.0
    %1777 = vmatpush2.msra.mxu0 0.0
    %1778 = vmatprep.subr.mxu0 0.0
    %1779 = vmatpush2.msra.mxu0 0.0
    %1780 = vmatprep.subr.mxu0 0.0
    %1781 = vmatpush2.msra.mxu0 0.0
    %1782 = vmatprep.subr.mxu0 0.0
    %1783 = vmatpush2.msra.mxu0 0.0
    %1784 = vmatprep.subr.mxu0 0.0
    %1785 = vmatpush2.msra.mxu0 0.0
    %1786 = vmatprep.subr.mxu0 0.0
    %1787 = vmatpush2.msra.mxu0 0.0
    %1788 = vmatprep.subr.mxu0 0.0
    %1789 = vmatpush2.msra.mxu0 0.0
    %1790 = vmatprep.subr.mxu0 0.0
    %1791 = vmatpush2.msra.mxu0 0.0
    %1792 = vmatprep.subr.mxu0 0.0
    %1793 = vmatpush2.msra.mxu0 0.0
    %1794 = vmatprep.subr.mxu0 0.0
    %1795 = vmatpush2.msra.mxu0 0.0
    %1796 = vmatprep.subr.mxu0 0.0
    %1797 = vmatpush2.msra.mxu0 0.0
    %1798 = vmatprep.subr.mxu0 0.0
    %1799 = vmatpush2.msra.mxu0 0.0
    %1800 = vmatprep.subr.mxu0 0.0
    %1801 = vmatpush2.msra.mxu0 0.0
    %1802 = vmatprep.subr.mxu0 0.0
    %1803 = vmatpush2.msra.mxu0 0.0
    %1804 = vmatprep.mubr.f32.mxu0 0.0
    %v1805 = vand.u32 %v1502, 4294901760
    %v1806 = vsub.f32 %v1502, %v1805
    %v1807 = vand.u32 %v1806, 4294901760
    %1808 = vmatmul.mubr.f32.gmra.mxu0 %v1807
    %v1809 = vpop.f32.mrf.mxu0
    %v1810 = vadd.f32 %v1735, %v1809
    %v1811 = vpop.f32.mrf.mxu0
    %1812 = vdwg.mxu0
    %1813 = vmatprep.subr.mxu0 0.0
    %1814 = vmatpush1.msra.mxu0 0.0
    %1815 = vmatprep.subr.mxu0 0.0
    %1816 = vmatpush1.msra.mxu0 0.0
    %1817 = vmatprep.subr.mxu0 0.0
    %1818 = vmatpush1.msra.mxu0 0.0
    %1819 = vmatprep.subr.mxu0 0.0
    %1820 = vmatpush1.msra.mxu0 0.0
    %1821 = vmatprep.subr.mxu0 0.0
    %1822 = vmatpush1.msra.mxu0 0.0
    %1823 = vmatprep.subr.mxu0 0.0
    %1824 = vmatpush1.msra.mxu0 0.0
    %1825 = vmatprep.subr.mxu0 0.0
    %1826 = vmatpush1.msra.mxu0 0.0
    %1827 = vmatprep.subr.mxu0 0.0
    %1828 = vmatpush1.msra.mxu0 0.0
    %1829 = vmatprep.subr.mxu0 0.0
    %1830 = vmatpush1.msra.mxu0 0.0
    %1831 = vmatprep.subr.mxu0 0.0
    %1832 = vmatpush1.msra.mxu0 0.0
    %1833 = vmatprep.subr.mxu0 0.0
    %1834 = vmatpush1.msra.mxu0 0.0
    %1835 = vmatprep.subr.mxu0 0.0
    %1836 = vmatpush1.msra.mxu0 0.0
    %1837 = vmatprep.subr.mxu0 0.0
    %1838 = vmatpush1.msra.mxu0 0.0
    %1839 = vmatprep.subr.mxu0 0.0
    %1840 = vmatpush1.msra.mxu0 0.0
    %1841 = vmatprep.subr.mxu0 0.0
    %v1842 = vand.u32 %v1492, 4294901760
    %v1843 = vsub.f32 %v1492, %v1842
    %v1844 = vand.u32 %v1843, 4294901760
    %1845 = vmatpush1.msra.mxu0 %v1844
    %1846 = vmatprep.subr.mxu0 0.0
    %v1847 = vand.u32 %v1491, 4294901760
    %v1848 = vsub.f32 %v1491, %v1847
    %v1849 = vand.u32 %v1848, 4294901760
    %1850 = vmatpush1.msra.mxu0 %v1849
    %1851 = vmatprep.subr.mxu0 0.0
    %1852 = vmatpush2.msra.mxu0 0.0
    %1853 = vmatprep.subr.mxu0 0.0
    %1854 = vmatpush2.msra.mxu0 0.0
    %1855 = vmatprep.subr.mxu0 0.0
    %1856 = vmatpush2.msra.mxu0 0.0
    %1857 = vmatprep.subr.mxu0 0.0
    %1858 = vmatpush2.msra.mxu0 0.0
    %1859 = vmatprep.subr.mxu0 0.0
    %1860 = vmatpush2.msra.mxu0 0.0
    %1861 = vmatprep.subr.mxu0 0.0
    %1862 = vmatpush2.msra.mxu0 0.0
    %1863 = vmatprep.subr.mxu0 0.0
    %1864 = vmatpush2.msra.mxu0 0.0
    %1865 = vmatprep.subr.mxu0 0.0
    %1866 = vmatpush2.msra.mxu0 0.0
    %1867 = vmatprep.subr.mxu0 0.0
    %1868 = vmatpush2.msra.mxu0 0.0
    %1869 = vmatprep.subr.mxu0 0.0
    %1870 = vmatpush2.msra.mxu0 0.0
    %1871 = vmatprep.subr.mxu0 0.0
    %1872 = vmatpush2.msra.mxu0 0.0
    %1873 = vmatprep.subr.mxu0 0.0
    %1874 = vmatpush2.msra.mxu0 0.0
    %1875 = vmatprep.subr.mxu0 0.0
    %1876 = vmatpush2.msra.mxu0 0.0
    %1877 = vmatprep.subr.mxu0 0.0
    %1878 = vmatpush2.msra.mxu0 0.0
    %1879 = vmatprep.subr.mxu0 0.0
    %1880 = vmatpush2.msra.mxu0 0.0
    %1881 = vmatprep.subr.mxu0 0.0
    %1882 = vmatpush2.msra.mxu0 0.0
    %1883 = vmatprep.mubr.f32.mxu0 0.0
    %v1884 = vand.u32 %v1502, 4294901760
    %1885 = vmatmul.mubr.f32.gmra.mxu0 %v1884
    %v1886 = vpop.f32.mrf.mxu0
    %v1887 = vadd.f32 %v1810, %v1886
    %v1888 = vpop.f32.mrf.mxu0
    %1889 = vdwg.mxu0
    %1890 = vmatprep.subr.mxu0 0.0
    %1891 = vmatpush1.msra.mxu0 0.0
    %1892 = vmatprep.subr.mxu0 0.0
    %1893 = vmatpush1.msra.mxu0 0.0
    %1894 = vmatprep.subr.mxu0 0.0
    %1895 = vmatpush1.msra.mxu0 0.0
    %1896 = vmatprep.subr.mxu0 0.0
    %1897 = vmatpush1.msra.mxu0 0.0
    %1898 = vmatprep.subr.mxu0 0.0
    %1899 = vmatpush1.msra.mxu0 0.0
    %1900 = vmatprep.subr.mxu0 0.0
    %1901 = vmatpush1.msra.mxu0 0.0
    %1902 = vmatprep.subr.mxu0 0.0
    %1903 = vmatpush1.msra.mxu0 0.0
    %1904 = vmatprep.subr.mxu0 0.0
    %1905 = vmatpush1.msra.mxu0 0.0
    %1906 = vmatprep.subr.mxu0 0.0
    %1907 = vmatpush1.msra.mxu0 0.0
    %1908 = vmatprep.subr.mxu0 0.0
    %1909 = vmatpush1.msra.mxu0 0.0
    %1910 = vmatprep.subr.mxu0 0.0
    %1911 = vmatpush1.msra.mxu0 0.0
    %1912 = vmatprep.subr.mxu0 0.0
    %1913 = vmatpush1.msra.mxu0 0.0
    %1914 = vmatprep.subr.mxu0 0.0
    %1915 = vmatpush1.msra.mxu0 0.0
    %1916 = vmatprep.subr.mxu0 0.0
    %1917 = vmatpush1.msra.mxu0 0.0
    %1918 = vmatprep.subr.mxu0 0.0
    %v1919 = vand.u32 %v1492, 4294901760
    %1920 = vmatpush1.msra.mxu0 %v1919
    %1921 = vmatprep.subr.mxu0 0.0
    %v1922 = vand.u32 %v1491, 4294901760
    %1923 = vmatpush1.msra.mxu0 %v1922
    %1924 = vmatprep.subr.mxu0 0.0
    %1925 = vmatpush2.msra.mxu0 0.0
    %1926 = vmatprep.subr.mxu0 0.0
    %1927 = vmatpush2.msra.mxu0 0.0
    %1928 = vmatprep.subr.mxu0 0.0
    %1929 = vmatpush2.msra.mxu0 0.0
    %1930 = vmatprep.subr.mxu0 0.0
    %1931 = vmatpush2.msra.mxu0 0.0
    %1932 = vmatprep.subr.mxu0 0.0
    %1933 = vmatpush2.msra.mxu0 0.0
    %1934 = vmatprep.subr.mxu0 0.0
    %1935 = vmatpush2.msra.mxu0 0.0
    %1936 = vmatprep.subr.mxu0 0.0
    %1937 = vmatpush2.msra.mxu0 0.0
    %1938 = vmatprep.subr.mxu0 0.0
    %1939 = vmatpush2.msra.mxu0 0.0
    %1940 = vmatprep.subr.mxu0 0.0
    %1941 = vmatpush2.msra.mxu0 0.0
    %1942 = vmatprep.subr.mxu0 0.0
    %1943 = vmatpush2.msra.mxu0 0.0
    %1944 = vmatprep.subr.mxu0 0.0
    %1945 = vmatpush2.msra.mxu0 0.0
    %1946 = vmatprep.subr.mxu0 0.0
    %1947 = vmatpush2.msra.mxu0 0.0
    %1948 = vmatprep.subr.mxu0 0.0
    %1949 = vmatpush2.msra.mxu0 0.0
    %1950 = vmatprep.subr.mxu0 0.0
    %1951 = vmatpush2.msra.mxu0 0.0
    %1952 = vmatprep.subr.mxu0 0.0
    %1953 = vmatpush2.msra.mxu0 0.0
    %1954 = vmatprep.subr.mxu0 0.0
    %1955 = vmatpush2.msra.mxu0 0.0
    %1956 = vmatprep.mubr.f32.mxu0 0.0
    %v1957 = vand.u32 %v1502, 4294901760
    %1958 = vmatmul.mubr.f32.gmra.mxu0 %v1957
    %v1959 = vpop.f32.mrf.mxu0
    %v1960 = vadd.f32 %v1887, %v1959
    %v1961 = vpop.f32.mrf.mxu0
    %1962 = vdwg.mxu0
    %v1963 = vmax.f32 %v1960, 0.0
    %v1964 = vld [vmem:[%s7] sm:$0x1]
    %v1966 = vlaneseq
    %v1967 = vshrl.u32 %v1966, 7
    %v1968 = vsub.s32 0, %v1967
    %v1969 = vrot.slane %v1964, %v1968
    %v1971 = vadd.f32 %v1963, %v1969
    %v1972 = vsel %vm1500, %v1971, -inf
    %1973 = vmax.xlane.f32.xlu0 %v1972
    %v1974 = vpop.xlane.xlu0 %1973
    %v1975 = vsub.f32 %v1971, %v1974
    %v1976 = vmul.f32 %v1975, 1.442695
    %v1977 = vpow.pop %v1976
    %v1978 = vsel %vm1500, %v1977, 0.0
    %1979 = vadd.xlane.f32.xlu0 %v1978
    %v1980 = vpop.xlane.xlu0 %1979
    %v1981 = vlog2.pop %v1980
    %v1982 = vmul.f32 %v1981, 0.6931472
    %v1983 = vsub.f32 %v1975, %v1982
    %1984 = vst.msk [vmem:[#allocation2] sm:$0xff] %vm1500, %v1983
    // Predicated region
    $region34: #{tpu_custom_call.1} parent=1 // pred_check
      _
    $region35: #{tpu_custom_call.1} parent=1 // pred_check_branch
      %1986 = sbr.rel (0) target = $region37
    $region36: #{tpu_custom_call.1} parent=1 // pred_region
      %s1988 = ssub.s32 128, 128
      %1989 = vsyncadd [#allocation3], %s1988
      %s1991 = sshll.u32 [#allocation2], 4
      %s1992 = int_to_ptr.vmem [resolvable:$true] %s1991
      %1994 = dma.vmem_to_hbm [thread:$0]  %s1992, 128, %s8, [#allocation3]
    $region37: #{tpu_custom_call.1} parent=1 // pred_fallthru
      _
    // Predicated region
    $region38: #{tpu_custom_call.1} parent=1 // pred_check
      _
    $region39: #{tpu_custom_call.1} parent=1 // pred_check_branch
      %1996 = sbr.rel (0) target = $region41
    $region40: #{tpu_custom_call.1} parent=1 // pred_region
      %1997 = dma.done [#allocation3], 128
    $region41: #{tpu_custom_call.1} parent=1 // pred_fallthru
      _
    %1998 = vsyncpa [#allocation3], 1

</llo_original>
